<compile_context>
chip_gen: v7x
topology: tpu7x:2x2x1
jax: 0.10.0
libtpu: 0.0.40
codegen_flags: <defaults>
</compile_context>

<pallas_src>
import jax
import jax.numpy as jnp
from jax.experimental import pallas as pl
from jax.experimental.pallas import tpu as pltpu

N_NODES = 16          # number of graph nodes
IN_F = 9              # input node feature dim (Linear(9, 32))
HID = 32              # hidden dim
VIS0 = 2048           # visual_dim for gcn_0      (graph 0)
VIS4 = 2048 // 8      # visual_dim for gcn_b21    (graph 4)


def _vmem():
    return pl.BlockSpec(memory_space=pltpu.MemorySpace.VMEM)


def _smem():
    return pl.BlockSpec(memory_space=pltpu.MemorySpace.SMEM)


# ---------------------------------------------------------------------------
# Single fused kernel: input_mlp + node_projection + both CMCosConv branches
# + both gcn projections + final score accumulation.
# ---------------------------------------------------------------------------
def sef_mgn_2_kernel(
        x_ref, w1_ref, b1_ref, gamma_ref, beta_ref, w2_ref, b2_ref, wp_ref,
        adj0_ref, vis0_ref, g0w_ref, g0b_ref, p0w_ref,
        adj4_ref, vis4_ref, g4w_ref, g4b_ref, p4w_ref,
        alpha_ref, bias_ref,                       # SMEM scalars
        out_ref):
    # ---- input_mlp --------------------------------------------------------
    x = x_ref[...]                                                    # [N, 9]
    h = jnp.dot(x, w1_ref[...], preferred_element_type=jnp.float32) + b1_ref[...]

    # BatchNorm1d in training mode: batch statistics, biased variance, eps=1e-5
    mean = jnp.mean(h, axis=0, keepdims=True)
    var = jnp.mean((h - mean) ** 2, axis=0, keepdims=True)
    h = (h - mean) * jax.lax.rsqrt(var + 1e-5) * gamma_ref[...] + beta_ref[...]

    # PReLU (single learnable alpha, read as SMEM scalar); Dropout(0) == id
    alpha = alpha_ref[0]
    h = jnp.where(h > 0, h, alpha * h)

    h2 = jnp.dot(h, w2_ref[...], preferred_element_type=jnp.float32) + b2_ref[...]  # [N, 32]

    # ---- node_projection (bias folded into bias_ref sum) ------------------
    total = jnp.dot(h2, wp_ref[...], preferred_element_type=jnp.float32)  # [N, 1]

    # ---- one CMCosConv branch + its projection -----------------------------
    def branch(vis, adj, gw, gb, pw):
        # Gram matrix in bf16 operands, f32 accumulation. Contracting the last
        # dim of both operands avoids materializing an explicit [D, N] copy.
        vb = vis.astype(jnp.bfloat16)
        g = jax.lax.dot_general(vb, vb, (((1,), (1,)), ((), ())),
                                preferred_element_type=jnp.float32)   # [N, N]
        n = g.shape[0]
        row = jax.lax.broadcasted_iota(jnp.int32, (n, n), 0)
        col = jax.lax.broadcasted_iota(jnp.int32, (n, n), 1)
        eye = (row == col).astype(jnp.float32)
        diag_c = jnp.sum(g * eye, axis=1, keepdims=True)              # [N, 1] = ||v_i||^2
        diag_r = jnp.sum(g * eye, axis=0, keepdims=True)              # [1, N] (g symmetric)
        cos = g * jax.lax.rsqrt(diag_c * diag_r + 1e-12)              # cosine similarity
        w_adj = cos * adj                                             # masked by adjacency
        hx = jnp.dot(h2, gw, preferred_element_type=jnp.float32) + gb # [N, 32]
        msg = jnp.dot(w_adj, hx, preferred_element_type=jnp.float32)  # [N, 32]
        return jnp.dot(msg, pw, preferred_element_type=jnp.float32)   # [N, 1]

    total = total + branch(vis0_ref[...], adj0_ref[...],
                           g0w_ref[...], g0b_ref[...], p0w_ref[...])
    total = total + branch(vis4_ref[...], adj4_ref[...],
                           g4w_ref[...], g4b_ref[...], p4w_ref[...])

    # Sum of the three projection biases (node + gcn_0 + gcn_b21), SMEM scalar.
    out_ref[...] = total + bias_ref[0]


def sef_mgn_2_forward(x, adj0, vis0, adj4, vis4, p):
    """x: [N, 9]; adj*: [N, N]; vis0: [N, 2048]; vis4: [N, 256] -> [N]."""
    bias_sum = (p["bp_node"] + p["proj0_b"] + p["proj4_b"]).reshape(1)
    alpha = p["prelu_alpha"].reshape(1)

    out = pl.pallas_call(
        sef_mgn_2_kernel,
        out_shape=jax.ShapeDtypeStruct((N_NODES, 1), jnp.float32),
        in_specs=[_vmem()] * 18 + [_smem(), _smem()],
        out_specs=_vmem(),
    )(x, p["w1"], p["b1"], p["bn_gamma"], p["bn_beta"], p["w2"], p["b2"],
      p["wp_node"],
      adj0, vis0, p["gcn0_w"], p["gcn0_b"], p["proj0_w"],
      adj4, vis4, p["gcn4_w"], p["gcn4_b"], p["proj4_w"],
      alpha, bias_sum)
    return out[:, 0]


sef_mgn_2_forward_jit = jax.jit(sef_mgn_2_forward)


# ---------------------------------------------------------------------------
# Deterministic parameter init (PyTorch-style uniform(-1/sqrt(fan_in), ...))
# ---------------------------------------------------------------------------
def linear_params(key, fan_in, fan_out):
    kw, kb = jax.random.split(key)
    bound = 1.0 / jnp.sqrt(fan_in)
    w = jax.random.uniform(kw, (fan_in, fan_out), jnp.float32, -bound, bound)
    b = jax.random.uniform(kb, (1, fan_out), jnp.float32, -bound, bound)
    return w, b


def make_adj(key, n):
    a = (jax.random.uniform(key, (n, n)) < 0.3).astype(jnp.float32)
    a = jnp.maximum(a, a.T)                                 # symmetric
    a = jnp.maximum(a, jnp.eye(n, dtype=jnp.float32))       # self loops
    return a


if __name__ == "__main__":
    key = jax.random.PRNGKey(0)
    keys = jax.random.split(key, 16)
    ki = iter(range(16))

    # ---- parameters -------------------------------------------------------
    params = {}
    params["w1"], params["b1"] = linear_params(keys[next(ki)], IN_F, HID)
    params["bn_gamma"] = jnp.ones((1, HID), jnp.float32)
    params["bn_beta"] = jnp.zeros((1, HID), jnp.float32)
    params["prelu_alpha"] = jnp.array([0.25], jnp.float32)
    params["w2"], params["b2"] = linear_params(keys[next(ki)], HID, HID)

    params["wp_node"], bpn = linear_params(keys[next(ki)], HID, 1)
    params["bp_node"] = bpn

    params["gcn0_w"], params["gcn0_b"] = linear_params(keys[next(ki)], HID, HID)
    params["proj0_w"], params["proj0_b"] = linear_params(keys[next(ki)], HID, 1)
    params["gcn4_w"], params["gcn4_b"] = linear_params(keys[next(ki)], HID, HID)
    params["proj4_w"], params["proj4_b"] = linear_params(keys[next(ki)], HID, 1)

    # ---- inputs -----------------------------------------------------------
    x = jax.random.normal(keys[next(ki)], (N_NODES, IN_F), jnp.float32)
    adj0 = make_adj(keys[next(ki)], N_NODES)
    adj4 = make_adj(keys[next(ki)], N_NODES)
    vis0 = jax.random.normal(keys[next(ki)], (N_NODES, VIS0), jnp.float32)
    vis4 = jax.random.normal(keys[next(ki)], (N_NODES, VIS4), jnp.float32)

    out = sef_mgn_2_forward_jit(x, adj0, vis0, adj4, vis4, params)
    out = jax.block_until_ready(out)
    assert out.shape == (N_NODES,)
    assert bool(jnp.all(jnp.isfinite(out)))
    print("KERNEL_OK")
</pallas_src>

<mosaic_0001>
module attributes {stable_mosaic.version = 11 : i64} {
  func.func @sef_mgn_2_kernel(%arg0: memref<16x9xf32, #tpu.memory_space<vmem>>, %arg1: memref<9x32xf32, #tpu.memory_space<vmem>>, %arg2: memref<1x32xf32, #tpu.memory_space<vmem>>, %arg3: memref<1x32xf32, #tpu.memory_space<vmem>>, %arg4: memref<1x32xf32, #tpu.memory_space<vmem>>, %arg5: memref<32x32xf32, #tpu.memory_space<vmem>>, %arg6: memref<1x32xf32, #tpu.memory_space<vmem>>, %arg7: memref<32x1xf32, #tpu.memory_space<vmem>>, %arg8: memref<16x16xf32, #tpu.memory_space<vmem>>, %arg9: memref<16x2048xf32, #tpu.memory_space<vmem>>, %arg10: memref<32x32xf32, #tpu.memory_space<vmem>>, %arg11: memref<1x32xf32, #tpu.memory_space<vmem>>, %arg12: memref<32x1xf32, #tpu.memory_space<vmem>>, %arg13: memref<16x16xf32, #tpu.memory_space<vmem>>, %arg14: memref<16x256xf32, #tpu.memory_space<vmem>>, %arg15: memref<32x32xf32, #tpu.memory_space<vmem>>, %arg16: memref<1x32xf32, #tpu.memory_space<vmem>>, %arg17: memref<32x1xf32, #tpu.memory_space<vmem>>, %arg18: memref<1xf32, #tpu.memory_space<smem>>, %arg19: memref<1xf32, #tpu.memory_space<smem>>, %arg20: memref<16x1xf32, #tpu.memory_space<vmem>>) attributes {dimension_semantics = [], scalar_prefetch = 0 : i64, scratch_operands = 0 : i64, tpu.core_type = #tpu.core_type<tc>} {
    %c0 = arith.constant 0 : index
    %c0_0 = arith.constant 0 : index
    %0 = vector.load %arg0[%c0, %c0_0] : memref<16x9xf32, #tpu.memory_space<vmem>>, vector<16x9xf32>
    %c0_1 = arith.constant 0 : index
    %c0_2 = arith.constant 0 : index
    %1 = vector.load %arg1[%c0_1, %c0_2] : memref<9x32xf32, #tpu.memory_space<vmem>>, vector<9x32xf32>
    %cst = arith.constant dense<0.000000e+00> : vector<16x32xf32>
    %2 = tpu.matmul %0, %1, %cst {dimension_numbers = #tpu.dot_dimension_numbers<[1], [0], [0], [1], [0, 0, 1, 1], [], []>} : vector<16x9xf32>, vector<9x32xf32>, vector<16x32xf32> -> vector<16x32xf32>
    %c0_3 = arith.constant 0 : index
    %c0_4 = arith.constant 0 : index
    %3 = vector.load %arg2[%c0_3, %c0_4] : memref<1x32xf32, #tpu.memory_space<vmem>>, vector<1x32xf32>
    %4 = vector.broadcast %3 : vector<1x32xf32> to vector<16x32xf32>
    %5 = arith.addf %2, %4 : vector<16x32xf32>
    %cst_5 = arith.constant dense<0.000000e+00> : vector<32xf32>
    %6 = vector.multi_reduction <add>, %5, %cst_5 [0] : vector<16x32xf32> to vector<32xf32>
    %7 = vector.shape_cast %6 : vector<32xf32> to vector<1x32xf32>
    %cst_6 = arith.constant 1.600000e+01 : f32
    %8 = vector.broadcast %cst_6 : f32 to vector<1x32xf32>
    %9 = arith.divf %7, %8 : vector<1x32xf32>
    %10 = vector.broadcast %9 : vector<1x32xf32> to vector<16x32xf32>
    %11 = arith.subf %5, %10 : vector<16x32xf32>
    %12 = arith.mulf %11, %11 : vector<16x32xf32>
    %cst_7 = arith.constant dense<0.000000e+00> : vector<32xf32>
    %13 = vector.multi_reduction <add>, %12, %cst_7 [0] : vector<16x32xf32> to vector<32xf32>
    %14 = vector.shape_cast %13 : vector<32xf32> to vector<1x32xf32>
    %cst_8 = arith.constant 1.600000e+01 : f32
    %15 = vector.broadcast %cst_8 : f32 to vector<1x32xf32>
    %16 = arith.divf %14, %15 : vector<1x32xf32>
    %17 = vector.broadcast %9 : vector<1x32xf32> to vector<16x32xf32>
    %18 = arith.subf %5, %17 : vector<16x32xf32>
    %cst_9 = arith.constant 9.99999974E-6 : f32
    %19 = vector.broadcast %cst_9 : f32 to vector<1x32xf32>
    %20 = arith.addf %16, %19 : vector<1x32xf32>
    %21 = math.rsqrt %20 : vector<1x32xf32>
    %22 = vector.broadcast %21 : vector<1x32xf32> to vector<16x32xf32>
    %23 = arith.mulf %18, %22 : vector<16x32xf32>
    %c0_10 = arith.constant 0 : index
    %c0_11 = arith.constant 0 : index
    %24 = vector.load %arg3[%c0_10, %c0_11] : memref<1x32xf32, #tpu.memory_space<vmem>>, vector<1x32xf32>
    %25 = vector.broadcast %24 : vector<1x32xf32> to vector<16x32xf32>
    %26 = arith.mulf %23, %25 : vector<16x32xf32>
    %c0_12 = arith.constant 0 : index
    %c0_13 = arith.constant 0 : index
    %27 = vector.load %arg4[%c0_12, %c0_13] : memref<1x32xf32, #tpu.memory_space<vmem>>, vector<1x32xf32>
    %28 = vector.broadcast %27 : vector<1x32xf32> to vector<16x32xf32>
    %29 = arith.addf %26, %28 : vector<16x32xf32>
    %c0_14 = arith.constant 0 : index
    %30 = memref.load %arg18[%c0_14] : memref<1xf32, #tpu.memory_space<smem>>
    %cst_15 = arith.constant 0.000000e+00 : f32
    %31 = vector.broadcast %cst_15 : f32 to vector<16x32xf32>
    %32 = arith.cmpf ogt, %29, %31 : vector<16x32xf32>
    %33 = vector.broadcast %30 : f32 to vector<16x32xf32>
    %34 = arith.mulf %33, %29 : vector<16x32xf32>
    %35 = arith.select %32, %29, %34 : vector<16x32xi1>, vector<16x32xf32>
    %c0_16 = arith.constant 0 : index
    %c0_17 = arith.constant 0 : index
    %36 = vector.load %arg5[%c0_16, %c0_17] : memref<32x32xf32, #tpu.memory_space<vmem>>, vector<32x32xf32>
    %cst_18 = arith.constant dense<0.000000e+00> : vector<16x32xf32>
    %37 = tpu.matmul %35, %36, %cst_18 {dimension_numbers = #tpu.dot_dimension_numbers<[1], [0], [0], [1], [0, 0, 1, 1], [], []>} : vector<16x32xf32>, vector<32x32xf32>, vector<16x32xf32> -> vector<16x32xf32>
    %c0_19 = arith.constant 0 : index
    %c0_20 = arith.constant 0 : index
    %38 = vector.load %arg6[%c0_19, %c0_20] : memref<1x32xf32, #tpu.memory_space<vmem>>, vector<1x32xf32>
    %39 = vector.broadcast %38 : vector<1x32xf32> to vector<16x32xf32>
    %40 = arith.addf %37, %39 : vector<16x32xf32>
    %c0_21 = arith.constant 0 : index
    %c0_22 = arith.constant 0 : index
    %41 = vector.load %arg7[%c0_21, %c0_22] : memref<32x1xf32, #tpu.memory_space<vmem>>, vector<32x1xf32>
    %cst_23 = arith.constant dense<0.000000e+00> : vector<16x1xf32>
    %42 = tpu.matmul %40, %41, %cst_23 {dimension_numbers = #tpu.dot_dimension_numbers<[1], [0], [0], [1], [0, 0, 1, 1], [], []>} : vector<16x32xf32>, vector<32x1xf32>, vector<16x1xf32> -> vector<16x1xf32>
    %c0_24 = arith.constant 0 : index
    %c0_25 = arith.constant 0 : index
    %43 = vector.load %arg9[%c0_24, %c0_25] : memref<16x2048xf32, #tpu.memory_space<vmem>>, vector<16x2048xf32>
    %c0_26 = arith.constant 0 : index
    %c0_27 = arith.constant 0 : index
    %44 = vector.load %arg8[%c0_26, %c0_27] : memref<16x16xf32, #tpu.memory_space<vmem>>, vector<16x16xf32>
    %c0_28 = arith.constant 0 : index
    %c0_29 = arith.constant 0 : index
    %45 = vector.load %arg10[%c0_28, %c0_29] : memref<32x32xf32, #tpu.memory_space<vmem>>, vector<32x32xf32>
    %c0_30 = arith.constant 0 : index
    %c0_31 = arith.constant 0 : index
    %46 = vector.load %arg11[%c0_30, %c0_31] : memref<1x32xf32, #tpu.memory_space<vmem>>, vector<1x32xf32>
    %c0_32 = arith.constant 0 : index
    %c0_33 = arith.constant 0 : index
    %47 = vector.load %arg12[%c0_32, %c0_33] : memref<32x1xf32, #tpu.memory_space<vmem>>, vector<32x1xf32>
    %48 = arith.truncf %43 : vector<16x2048xf32> to vector<16x2048xbf16>
    %cst_34 = arith.constant dense<0.000000e+00> : vector<16x16xf32>
    %49 = tpu.matmul %48, %48, %cst_34 {dimension_numbers = #tpu.dot_dimension_numbers<[1], [1], [0], [0], [0, 0, 1, 0], [], []>} : vector<16x2048xbf16>, vector<16x2048xbf16>, vector<16x16xf32> -> vector<16x16xf32>
    %50 = tpu.iota {dimensions = array<i32: 0>} : vector<16x16xi32>
    %51 = tpu.iota {dimensions = array<i32: 1>} : vector<16x16xi32>
    %52 = arith.cmpi eq, %50, %51 : vector<16x16xi32>
    %53 = arith.extui %52 : vector<16x16xi1> to vector<16x16xi32>
    %54 = arith.sitofp %53 : vector<16x16xi32> to vector<16x16xf32>
    %55 = arith.mulf %49, %54 : vector<16x16xf32>
    %cst_35 = arith.constant dense<0.000000e+00> : vector<16xf32>
    %56 = vector.multi_reduction <add>, %55, %cst_35 [1] : vector<16x16xf32> to vector<16xf32>
    %57 = vector.shape_cast %56 : vector<16xf32> to vector<16x1xf32>
    %58 = arith.mulf %49, %54 : vector<16x16xf32>
    %cst_36 = arith.constant dense<0.000000e+00> : vector<16xf32>
    %59 = vector.multi_reduction <add>, %58, %cst_36 [0] : vector<16x16xf32> to vector<16xf32>
    %60 = vector.shape_cast %59 : vector<16xf32> to vector<1x16xf32>
    %61 = vector.broadcast %57 : vector<16x1xf32> to vector<16x16xf32>
    %62 = vector.broadcast %60 : vector<1x16xf32> to vector<16x16xf32>
    %63 = arith.mulf %61, %62 : vector<16x16xf32>
    %cst_37 = arith.constant 9.99999996E-13 : f32
    %64 = vector.broadcast %cst_37 : f32 to vector<16x16xf32>
    %65 = arith.addf %63, %64 : vector<16x16xf32>
    %66 = math.rsqrt %65 : vector<16x16xf32>
    %67 = arith.mulf %49, %66 : vector<16x16xf32>
    %68 = arith.mulf %67, %44 : vector<16x16xf32>
    %cst_38 = arith.constant dense<0.000000e+00> : vector<16x32xf32>
    %69 = tpu.matmul %40, %45, %cst_38 {dimension_numbers = #tpu.dot_dimension_numbers<[1], [0], [0], [1], [0, 0, 1, 1], [], []>} : vector<16x32xf32>, vector<32x32xf32>, vector<16x32xf32> -> vector<16x32xf32>
    %70 = vector.broadcast %46 : vector<1x32xf32> to vector<16x32xf32>
    %71 = arith.addf %69, %70 : vector<16x32xf32>
    %cst_39 = arith.constant dense<0.000000e+00> : vector<16x32xf32>
    %72 = tpu.matmul %68, %71, %cst_39 {dimension_numbers = #tpu.dot_dimension_numbers<[1], [0], [0], [1], [0, 0, 1, 1], [], []>} : vector<16x16xf32>, vector<16x32xf32>, vector<16x32xf32> -> vector<16x32xf32>
    %cst_40 = arith.constant dense<0.000000e+00> : vector<16x1xf32>
    %73 = tpu.matmul %72, %47, %cst_40 {dimension_numbers = #tpu.dot_dimension_numbers<[1], [0], [0], [1], [0, 0, 1, 1], [], []>} : vector<16x32xf32>, vector<32x1xf32>, vector<16x1xf32> -> vector<16x1xf32>
    %74 = arith.addf %42, %73 : vector<16x1xf32>
    %c0_41 = arith.constant 0 : index
    %c0_42 = arith.constant 0 : index
    %75 = vector.load %arg14[%c0_41, %c0_42] : memref<16x256xf32, #tpu.memory_space<vmem>>, vector<16x256xf32>
    %c0_43 = arith.constant 0 : index
    %c0_44 = arith.constant 0 : index
    %76 = vector.load %arg13[%c0_43, %c0_44] : memref<16x16xf32, #tpu.memory_space<vmem>>, vector<16x16xf32>
    %c0_45 = arith.constant 0 : index
    %c0_46 = arith.constant 0 : index
    %77 = vector.load %arg15[%c0_45, %c0_46] : memref<32x32xf32, #tpu.memory_space<vmem>>, vector<32x32xf32>
    %c0_47 = arith.constant 0 : index
    %c0_48 = arith.constant 0 : index
    %78 = vector.load %arg16[%c0_47, %c0_48] : memref<1x32xf32, #tpu.memory_space<vmem>>, vector<1x32xf32>
    %c0_49 = arith.constant 0 : index
    %c0_50 = arith.constant 0 : index
    %79 = vector.load %arg17[%c0_49, %c0_50] : memref<32x1xf32, #tpu.memory_space<vmem>>, vector<32x1xf32>
    %80 = arith.truncf %75 : vector<16x256xf32> to vector<16x256xbf16>
    %cst_51 = arith.constant dense<0.000000e+00> : vector<16x16xf32>
    %81 = tpu.matmul %80, %80, %cst_51 {dimension_numbers = #tpu.dot_dimension_numbers<[1], [1], [0], [0], [0, 0, 1, 0], [], []>} : vector<16x256xbf16>, vector<16x256xbf16>, vector<16x16xf32> -> vector<16x16xf32>
    %82 = tpu.iota {dimensions = array<i32: 0>} : vector<16x16xi32>
    %83 = tpu.iota {dimensions = array<i32: 1>} : vector<16x16xi32>
    %84 = arith.cmpi eq, %82, %83 : vector<16x16xi32>
    %85 = arith.extui %84 : vector<16x16xi1> to vector<16x16xi32>
    %86 = arith.sitofp %85 : vector<16x16xi32> to vector<16x16xf32>
    %87 = arith.mulf %81, %86 : vector<16x16xf32>
    %cst_52 = arith.constant dense<0.000000e+00> : vector<16xf32>
    %88 = vector.multi_reduction <add>, %87, %cst_52 [1] : vector<16x16xf32> to vector<16xf32>
    %89 = vector.shape_cast %88 : vector<16xf32> to vector<16x1xf32>
    %90 = arith.mulf %81, %86 : vector<16x16xf32>
    %cst_53 = arith.constant dense<0.000000e+00> : vector<16xf32>
    %91 = vector.multi_reduction <add>, %90, %cst_53 [0] : vector<16x16xf32> to vector<16xf32>
    %92 = vector.shape_cast %91 : vector<16xf32> to vector<1x16xf32>
    %93 = vector.broadcast %89 : vector<16x1xf32> to vector<16x16xf32>
    %94 = vector.broadcast %92 : vector<1x16xf32> to vector<16x16xf32>
    %95 = arith.mulf %93, %94 : vector<16x16xf32>
    %cst_54 = arith.constant 9.99999996E-13 : f32
    %96 = vector.broadcast %cst_54 : f32 to vector<16x16xf32>
    %97 = arith.addf %95, %96 : vector<16x16xf32>
    %98 = math.rsqrt %97 : vector<16x16xf32>
    %99 = arith.mulf %81, %98 : vector<16x16xf32>
    %100 = arith.mulf %99, %76 : vector<16x16xf32>
    %cst_55 = arith.constant dense<0.000000e+00> : vector<16x32xf32>
    %101 = tpu.matmul %40, %77, %cst_55 {dimension_numbers = #tpu.dot_dimension_numbers<[1], [0], [0], [1], [0, 0, 1, 1], [], []>} : vector<16x32xf32>, vector<32x32xf32>, vector<16x32xf32> -> vector<16x32xf32>
    %102 = vector.broadcast %78 : vector<1x32xf32> to vector<16x32xf32>
    %103 = arith.addf %101, %102 : vector<16x32xf32>
    %cst_56 = arith.constant dense<0.000000e+00> : vector<16x32xf32>
    %104 = tpu.matmul %100, %103, %cst_56 {dimension_numbers = #tpu.dot_dimension_numbers<[1], [0], [0], [1], [0, 0, 1, 1], [], []>} : vector<16x16xf32>, vector<16x32xf32>, vector<16x32xf32> -> vector<16x32xf32>
    %cst_57 = arith.constant dense<0.000000e+00> : vector<16x1xf32>
    %105 = tpu.matmul %104, %79, %cst_57 {dimension_numbers = #tpu.dot_dimension_numbers<[1], [0], [0], [1], [0, 0, 1, 1], [], []>} : vector<16x32xf32>, vector<32x1xf32>, vector<16x1xf32> -> vector<16x1xf32>
    %106 = arith.addf %74, %105 : vector<16x1xf32>
    %c0_58 = arith.constant 0 : index
    %107 = memref.load %arg19[%c0_58] : memref<1xf32, #tpu.memory_space<smem>>
    %108 = vector.broadcast %107 : f32 to vector<16x1xf32>
    %109 = arith.addf %106, %108 : vector<16x1xf32>
    %c0_59 = arith.constant 0 : index
    %c0_60 = arith.constant 0 : index
    %110 = vector.load %arg20[%c0_59, %c0_60] : memref<16x1xf32, #tpu.memory_space<vmem>>, vector<16x1xf32>
    tpu.vector_store %arg20[%c0_59, %c0_60], %109 {strides = array<i32>} : memref<16x1xf32, #tpu.memory_space<vmem>>, vector<16x1xf32>,
    return
  }
}

</mosaic_0001>

<llo_original>
// kernel: sef_mgn_2_forward.1
$region0: #{sef_mgn_2_forward.1}
  #allocation0 [shape = 'u32[]', space=smem, size = 0x4, offset = 0x4, fixed_abs, tag = 'smem constant byte address 0x4 - core index']
  #allocation1 [shape = 'u32[144,128]{1,0:T(1,128)}', space=vmem, size = 0x12000, scoped, tag = 'internal scratch']
  #allocation2 [shape = 'f32[1]{0:T(128)S(6)}', space=smem, size = 0x200, scoped, tag = 'scoped memory for sef_mgn_2_forward.1']
  #allocation3 [shape = 'f32[1]{0:T(128)S(6)}', space=smem, size = 0x200, scoped, tag = 'scoped memory for sef_mgn_2_forward.1']
  %s0 = inlined_call_operand.hbm [shape: f32[16,9], index: 0, kind: input, shape index: {}]
  %s1 = inlined_call_operand.vmem [shape: f32[9,32], index: 1, kind: input, shape index: {}]
  %s2 = inlined_call_operand.hbm [shape: f32[1,32], index: 2, kind: input, shape index: {}]
  %s3 = inlined_call_operand.vmem [shape: f32[1,32], index: 3, kind: input, shape index: {}]
  %s4 = inlined_call_operand.vmem [shape: f32[1,32], index: 4, kind: input, shape index: {}]
  %s5 = inlined_call_operand.vmem [shape: f32[32,32], index: 5, kind: input, shape index: {}]
  %s6 = inlined_call_operand.vmem [shape: f32[1,32], index: 6, kind: input, shape index: {}]
  %s7 = inlined_call_operand.vmem [shape: f32[32,1], index: 7, kind: input, shape index: {}]
  %s8 = inlined_call_operand.hbm [shape: f32[16,16], index: 8, kind: input, shape index: {}]
  %s9 = inlined_call_operand.hbm [shape: f32[16,2048], index: 9, kind: input, shape index: {}]
  %s10 = inlined_call_operand.vmem [shape: f32[32,32], index: 10, kind: input, shape index: {}]
  %s11 = inlined_call_operand.vmem [shape: f32[1,32], index: 11, kind: input, shape index: {}]
  %s12 = inlined_call_operand.vmem [shape: f32[32,1], index: 12, kind: input, shape index: {}]
  %s13 = inlined_call_operand.hbm [shape: f32[16,16], index: 13, kind: input, shape index: {}]
  %s14 = inlined_call_operand.vmem [shape: f32[16,256], index: 14, kind: input, shape index: {}]
  %s15 = inlined_call_operand.vmem [shape: f32[32,32], index: 15, kind: input, shape index: {}]
  %s16 = inlined_call_operand.vmem [shape: f32[1,32], index: 16, kind: input, shape index: {}]
  %s17 = inlined_call_operand.vmem [shape: f32[32,1], index: 17, kind: input, shape index: {}]
  %s18 = inlined_call_operand.<no memory space> [shape: f32[1], index: 18, kind: input, shape index: {}]
  %s19 = inlined_call_operand.<no memory space> [shape: f32[1], index: 19, kind: input, shape index: {}]
  %s20 = inlined_call_operand.vmem [shape: f32[16,1], index: 20, kind: output, shape index: {}]
  %s21 = sld [smem:[#allocation0]]
  $region110: #{sef_mgn_2_forward.1} parent=0
    _
  %s23 = ssub.s32 1, %s21
  %s24 = scalar_select 0, %s23, %s21
  %25 = sst [smem:[#allocation2]] %s18
  %26 = sst [smem:[#allocation3]] %s19
  $region1: #{sef_mgn_2_forward.1} parent=0
    #allocation4 [shape = 'u8[8192]{0}', space=vmem, size = 0x2000, scoped, tag = 'input window, operand 0, single buffered']
    #allocation5 [shape = 's32[1]{0}', space=sflag, size = 0x4, scoped, tag = 'scoped memory for sef_mgn_2_forward.1']
    #allocation6 [shape = 'u8[512]{0}', space=vmem, size = 0x400, scoped, tag = 'input window, operand 2, single buffered']
    #allocation7 [shape = 's32[1]{0}', space=sflag, size = 0x4, scoped, tag = 'scoped memory for sef_mgn_2_forward.1']
    #allocation8 [shape = 'u8[8192]{0}', space=vmem, size = 0x2000, scoped, tag = 'input window, operand 8, single buffered']
    #allocation9 [shape = 'u8[131072]{0}', space=vmem, size = 0x20000, scoped, tag = 'input window, operand 9, single buffered']
    #allocation10 [shape = 's32[1]{0}', space=sflag, size = 0x4, scoped, tag = 'scoped memory for sef_mgn_2_forward.1']
    #allocation11 [shape = 'u8[8192]{0}', space=vmem, size = 0x2000, scoped, tag = 'input window, operand 13, single buffered']
    %27 = vsyncpa [#allocation5], 0
    %28 = vsyncpa [#allocation7], 0
    %29 = vsyncpa [#allocation10], 0
    // Predicated region
    $region2: #{sef_mgn_2_forward.1} parent=1 // pred_check
      _
    $region3: #{sef_mgn_2_forward.1} parent=1 // pred_check_branch
      %31 = sbr.rel (0) target = $region5
    $region4: #{sef_mgn_2_forward.1} parent=1 // pred_region
      %s33 = ssub.s32 256, 256
      %34 = vsyncadd [#allocation5], %s33
      %s35 = sshll.u32 [#allocation4], 4
      %s36 = int_to_ptr.vmem [resolvable:$true] %s35
      %41 = dma.hbm_to_vmem [thread:$0]  %s0, 256, %s36, [#allocation5], 128, 128, 8
    $region5: #{sef_mgn_2_forward.1} parent=1 // pred_fallthru
      _
    // Predicated region
    $region6: #{sef_mgn_2_forward.1} parent=1 // pred_check
      _
    $region7: #{sef_mgn_2_forward.1} parent=1 // pred_check_branch
      %43 = sbr.rel (0) target = $region9
    $region8: #{sef_mgn_2_forward.1} parent=1 // pred_region
      _
    $region9: #{sef_mgn_2_forward.1} parent=1 // pred_fallthru
      _
    // Predicated region
    $region10: #{sef_mgn_2_forward.1} parent=1 // pred_check
      _
    $region11: #{sef_mgn_2_forward.1} parent=1 // pred_check_branch
      %45 = sbr.rel (0) target = $region13
    $region12: #{sef_mgn_2_forward.1} parent=1 // pred_region
      %s47 = ssub.s32 16, 16
      %48 = vsyncadd [#allocation7], %s47
      %s50 = sshll.u32 [#allocation6], 4
      %s51 = int_to_ptr.vmem [resolvable:$true] %s50
      %53 = dma.hbm_to_vmem [thread:$0]  %s2, 16, %s51, [#allocation7]
    $region13: #{sef_mgn_2_forward.1} parent=1 // pred_fallthru
      _
    // Predicated region
    $region14: #{sef_mgn_2_forward.1} parent=1 // pred_check
      _
    $region15: #{sef_mgn_2_forward.1} parent=1 // pred_check_branch
      %55 = sbr.rel (0) target = $region17
    $region16: #{sef_mgn_2_forward.1} parent=1 // pred_region
      _
    $region17: #{sef_mgn_2_forward.1} parent=1 // pred_fallthru
      _
    // Predicated region
    $region18: #{sef_mgn_2_forward.1} parent=1 // pred_check
      _
    $region19: #{sef_mgn_2_forward.1} parent=1 // pred_check_branch
      %57 = sbr.rel (0) target = $region21
    $region20: #{sef_mgn_2_forward.1} parent=1 // pred_region
      _
    $region21: #{sef_mgn_2_forward.1} parent=1 // pred_fallthru
      _
    // Predicated region
    $region22: #{sef_mgn_2_forward.1} parent=1 // pred_check
      _
    $region23: #{sef_mgn_2_forward.1} parent=1 // pred_check_branch
      %59 = sbr.rel (0) target = $region25
    $region24: #{sef_mgn_2_forward.1} parent=1 // pred_region
      _
    $region25: #{sef_mgn_2_forward.1} parent=1 // pred_fallthru
      _
    // Predicated region
    $region26: #{sef_mgn_2_forward.1} parent=1 // pred_check
      _
    $region27: #{sef_mgn_2_forward.1} parent=1 // pred_check_branch
      %61 = sbr.rel (0) target = $region29
    $region28: #{sef_mgn_2_forward.1} parent=1 // pred_region
      _
    $region29: #{sef_mgn_2_forward.1} parent=1 // pred_fallthru
      _
    // Predicated region
    $region30: #{sef_mgn_2_forward.1} parent=1 // pred_check
      _
    $region31: #{sef_mgn_2_forward.1} parent=1 // pred_check_branch
      %63 = sbr.rel (0) target = $region33
    $region32: #{sef_mgn_2_forward.1} parent=1 // pred_region
      _
    $region33: #{sef_mgn_2_forward.1} parent=1 // pred_fallthru
      _
    // Predicated region
    $region34: #{sef_mgn_2_forward.1} parent=1 // pred_check
      _
    $region35: #{sef_mgn_2_forward.1} parent=1 // pred_check_branch
      %65 = sbr.rel (0) target = $region37
    $region36: #{sef_mgn_2_forward.1} parent=1 // pred_region
      %s67 = ssub.s32 256, 256
      %68 = vsyncadd [#allocation7], %s67
      %s69 = sshll.u32 [#allocation8], 4
      %s70 = int_to_ptr.vmem [resolvable:$true] %s69
      %75 = dma.hbm_to_vmem [thread:$0]  %s8, 256, %s70, [#allocation7], 128, 128, 8
    $region37: #{sef_mgn_2_forward.1} parent=1 // pred_fallthru
      _
    // Predicated region
    $region38: #{sef_mgn_2_forward.1} parent=1 // pred_check
      _
    $region39: #{sef_mgn_2_forward.1} parent=1 // pred_check_branch
      %77 = sbr.rel (0) target = $region41
    $region40: #{sef_mgn_2_forward.1} parent=1 // pred_region
      %s79 = ssub.s32 4096, 4096
      %80 = vsyncadd [#allocation10], %s79
      %s81 = sshll.u32 [#allocation9], 4
      %s82 = int_to_ptr.vmem [resolvable:$true] %s81
      %87 = dma.hbm_to_vmem [thread:$0]  %s9, 4096, %s82, [#allocation10], 2048, 2048, 128
    $region41: #{sef_mgn_2_forward.1} parent=1 // pred_fallthru
      _
    // Predicated region
    $region42: #{sef_mgn_2_forward.1} parent=1 // pred_check
      _
    $region43: #{sef_mgn_2_forward.1} parent=1 // pred_check_branch
      %89 = sbr.rel (0) target = $region45
    $region44: #{sef_mgn_2_forward.1} parent=1 // pred_region
      _
    $region45: #{sef_mgn_2_forward.1} parent=1 // pred_fallthru
      _
    // Predicated region
    $region46: #{sef_mgn_2_forward.1} parent=1 // pred_check
      _
    $region47: #{sef_mgn_2_forward.1} parent=1 // pred_check_branch
      %91 = sbr.rel (0) target = $region49
    $region48: #{sef_mgn_2_forward.1} parent=1 // pred_region
      _
    $region49: #{sef_mgn_2_forward.1} parent=1 // pred_fallthru
      _
    // Predicated region
    $region50: #{sef_mgn_2_forward.1} parent=1 // pred_check
      _
    $region51: #{sef_mgn_2_forward.1} parent=1 // pred_check_branch
      %93 = sbr.rel (0) target = $region53
    $region52: #{sef_mgn_2_forward.1} parent=1 // pred_region
      _
    $region53: #{sef_mgn_2_forward.1} parent=1 // pred_fallthru
      _
    // Predicated region
    $region54: #{sef_mgn_2_forward.1} parent=1 // pred_check
      _
    $region55: #{sef_mgn_2_forward.1} parent=1 // pred_check_branch
      %95 = sbr.rel (0) target = $region57
    $region56: #{sef_mgn_2_forward.1} parent=1 // pred_region
      %s97 = ssub.s32 256, 256
      %98 = vsyncadd [#allocation10], %s97
      %s99 = sshll.u32 [#allocation11], 4
      %s100 = int_to_ptr.vmem [resolvable:$true] %s99
      %105 = dma.hbm_to_vmem [thread:$0]  %s13, 256, %s100, [#allocation10], 128, 128, 8
    $region57: #{sef_mgn_2_forward.1} parent=1 // pred_fallthru
      _
    // Predicated region
    $region58: #{sef_mgn_2_forward.1} parent=1 // pred_check
      _
    $region59: #{sef_mgn_2_forward.1} parent=1 // pred_check_branch
      %107 = sbr.rel (0) target = $region61
    $region60: #{sef_mgn_2_forward.1} parent=1 // pred_region
      _
    $region61: #{sef_mgn_2_forward.1} parent=1 // pred_fallthru
      _
    // Predicated region
    $region62: #{sef_mgn_2_forward.1} parent=1 // pred_check
      _
    $region63: #{sef_mgn_2_forward.1} parent=1 // pred_check_branch
      %109 = sbr.rel (0) target = $region65
    $region64: #{sef_mgn_2_forward.1} parent=1 // pred_region
      _
    $region65: #{sef_mgn_2_forward.1} parent=1 // pred_fallthru
      _
    // Predicated region
    $region66: #{sef_mgn_2_forward.1} parent=1 // pred_check
      _
    $region67: #{sef_mgn_2_forward.1} parent=1 // pred_check_branch
      %111 = sbr.rel (0) target = $region69
    $region68: #{sef_mgn_2_forward.1} parent=1 // pred_region
      _
    $region69: #{sef_mgn_2_forward.1} parent=1 // pred_fallthru
      _
    // Predicated region
    $region70: #{sef_mgn_2_forward.1} parent=1 // pred_check
      _
    $region71: #{sef_mgn_2_forward.1} parent=1 // pred_check_branch
      %113 = sbr.rel (0) target = $region73
    $region72: #{sef_mgn_2_forward.1} parent=1 // pred_region
      _
    $region73: #{sef_mgn_2_forward.1} parent=1 // pred_fallthru
      _
    // Predicated region
    $region74: #{sef_mgn_2_forward.1} parent=1 // pred_check
      _
    $region75: #{sef_mgn_2_forward.1} parent=1 // pred_check_branch
      %115 = sbr.rel (0) target = $region77
    $region76: #{sef_mgn_2_forward.1} parent=1 // pred_region
      _
    $region77: #{sef_mgn_2_forward.1} parent=1 // pred_fallthru
      _
    // Predicated region
    $region78: #{sef_mgn_2_forward.1} parent=1 // pred_check
      _
    $region79: #{sef_mgn_2_forward.1} parent=1 // pred_check_branch
      %117 = sbr.rel (0) target = $region81
    $region80: #{sef_mgn_2_forward.1} parent=1 // pred_region
      _
    $region81: #{sef_mgn_2_forward.1} parent=1 // pred_fallthru
      _
    // Predicated region
    $region82: #{sef_mgn_2_forward.1} parent=1 // pred_check
      _
    $region83: #{sef_mgn_2_forward.1} parent=1 // pred_check_branch
      %119 = sbr.rel (0) target = $region85
    $region84: #{sef_mgn_2_forward.1} parent=1 // pred_region
      %120 = dma.done [#allocation5], 256
    $region85: #{sef_mgn_2_forward.1} parent=1 // pred_fallthru
      _
    // Predicated region
    $region86: #{sef_mgn_2_forward.1} parent=1 // pred_check
      _
    $region87: #{sef_mgn_2_forward.1} parent=1 // pred_check_branch
      %122 = sbr.rel (0) target = $region89
    $region88: #{sef_mgn_2_forward.1} parent=1 // pred_region
      %123 = dma.done [#allocation7], 16
    $region89: #{sef_mgn_2_forward.1} parent=1 // pred_fallthru
      _
    // Predicated region
    $region90: #{sef_mgn_2_forward.1} parent=1 // pred_check
      _
    $region91: #{sef_mgn_2_forward.1} parent=1 // pred_check_branch
      %125 = sbr.rel (0) target = $region93
    $region92: #{sef_mgn_2_forward.1} parent=1 // pred_region
      %126 = dma.done [#allocation7], 256
    $region93: #{sef_mgn_2_forward.1} parent=1 // pred_fallthru
      _
    // Predicated region
    $region94: #{sef_mgn_2_forward.1} parent=1 // pred_check
      _
    $region95: #{sef_mgn_2_forward.1} parent=1 // pred_check_branch
      %128 = sbr.rel (0) target = $region97
    $region96: #{sef_mgn_2_forward.1} parent=1 // pred_region
      %129 = dma.done [#allocation10], 4096
    $region97: #{sef_mgn_2_forward.1} parent=1 // pred_fallthru
      _
    // Predicated region
    $region98: #{sef_mgn_2_forward.1} parent=1 // pred_check
      _
    $region99: #{sef_mgn_2_forward.1} parent=1 // pred_check_branch
      %131 = sbr.rel (0) target = $region101
    $region100: #{sef_mgn_2_forward.1} parent=1 // pred_region
      %132 = dma.done [#allocation10], 256
    $region101: #{sef_mgn_2_forward.1} parent=1 // pred_fallthru
      _
    %v134 = vld [vmem:[#allocation4] sm:$0xff]
    %v135 = vld [vmem:[#allocation4 + $0x8] sm:$0xff]
    %v136 = vld [vmem:[%s1] sm:$0xff]
    %v137 = vld [vmem:[%s1 + $0x8] sm:$0x1]
    %v138 = vld [vmem:[#allocation6] sm:$0x1]
    %v140 = vlaneseq
    %v141 = vshrl.u32 %v140, 7
    %v142 = vsub.s32 0, %v141
    %v143 = vrot.slane %v138, %v142
    %vm145 = vcmask 72704
    %v147 = vsel %vm145, %v134, 0
    %v150 = vsel %vm145, %v135, 0
    %vm152 = vcmask 1040384
    %v154 = vsel %vm152, %v137, 0
    %156 = vmatprep.subr.mxu0 0.0
    %157 = vmatpush1.msra.mxu0 %v136
    %158 = vmatprep.subr.mxu0 0.0
    %159 = vmatpush1.msra.mxu0 %v154
    %160 = vmatprep.subr.mxu0 0.0
    %161 = vmatpush1.msra.mxu0 0.0
    %162 = vmatprep.subr.mxu0 0.0
    %163 = vmatpush1.msra.mxu0 0.0
    %164 = vmatprep.subr.mxu0 0.0
    %165 = vmatpush1.msra.mxu0 0.0
    %166 = vmatprep.subr.mxu0 0.0
    %167 = vmatpush1.msra.mxu0 0.0
    %168 = vmatprep.subr.mxu0 0.0
    %169 = vmatpush1.msra.mxu0 0.0
    %170 = vmatprep.subr.mxu0 0.0
    %171 = vmatpush1.msra.mxu0 0.0
    %172 = vmatprep.subr.mxu0 0.0
    %173 = vmatpush1.msra.mxu0 0.0
    %174 = vmatprep.subr.mxu0 0.0
    %175 = vmatpush1.msra.mxu0 0.0
    %176 = vmatprep.subr.mxu0 0.0
    %177 = vmatpush1.msra.mxu0 0.0
    %178 = vmatprep.subr.mxu0 0.0
    %179 = vmatpush1.msra.mxu0 0.0
    %180 = vmatprep.subr.mxu0 0.0
    %181 = vmatpush1.msra.mxu0 0.0
    %182 = vmatprep.subr.mxu0 0.0
    %183 = vmatpush1.msra.mxu0 0.0
    %184 = vmatprep.subr.mxu0 0.0
    %185 = vmatpush1.msra.mxu0 0.0
    %186 = vmatprep.subr.mxu0 0.0
    %187 = vmatpush1.msra.mxu0 0.0
    %188 = vmatprep.subr.mxu0 0.0
    %189 = vmatpush1.msra.mxu0 0.0
    %190 = vmatprep.subr.mxu0 0.0
    %191 = vmatpush1.msra.mxu0 0.0
    %192 = vmatprep.subr.mxu0 0.0
    %193 = vmatpush1.msra.mxu0 0.0
    %194 = vmatprep.subr.mxu0 0.0
    %195 = vmatpush1.msra.mxu0 0.0
    %196 = vmatprep.subr.mxu0 0.0
    %197 = vmatpush1.msra.mxu0 0.0
    %198 = vmatprep.subr.mxu0 0.0
    %199 = vmatpush1.msra.mxu0 0.0
    %200 = vmatprep.subr.mxu0 0.0
    %201 = vmatpush1.msra.mxu0 0.0
    %202 = vmatprep.subr.mxu0 0.0
    %203 = vmatpush1.msra.mxu0 0.0
    %204 = vmatprep.subr.mxu0 0.0
    %205 = vmatpush1.msra.mxu0 0.0
    %206 = vmatprep.subr.mxu0 0.0
    %207 = vmatpush1.msra.mxu0 0.0
    %208 = vmatprep.subr.mxu0 0.0
    %209 = vmatpush1.msra.mxu0 0.0
    %210 = vmatprep.subr.mxu0 0.0
    %211 = vmatpush1.msra.mxu0 0.0
    %212 = vmatprep.subr.mxu0 0.0
    %213 = vmatpush1.msra.mxu0 0.0
    %214 = vmatprep.subr.mxu0 0.0
    %215 = vmatpush1.msra.mxu0 0.0
    %216 = vmatprep.subr.mxu0 0.0
    %217 = vmatpush1.msra.mxu0 0.0
    %218 = vmatprep.subr.mxu0 0.0
    %219 = vmatpush1.msra.mxu0 0.0
    %220 = vmatprep.mubr.f32.mxu0 0.0
    %221 = vmatmul.mubr.f32.gmra.mrb[0].mxu0 %v147
    %v222 = vpop.f32.mrb[0].mxu0
    %v223 = vadd.f32 %v143, %v222
    %v224 = vpop.f32.mrb[0].mxu0
    %225 = vmatprep.mubr.f32.mxu0 0.0
    %226 = vmatmul.mubr.f32.gmra.mrb[0].mxu0 %v150
    %v227 = vpop.f32.mrb[0].mxu0
    %v228 = vadd.f32 %v143, %v227
    %v229 = vpop.f32.mrb[0].mxu0
    %230 = vdwg.mxu0
    %vm231 = vcmask 261120
    %v232 = vsel %vm231, %v223, 0.0
    %v233 = vsel %vm231, %v228, 0.0
    %v234 = vadd.f32 %v232, %v233
    %v235 = vrot.slane %v234, 4
    %v236 = vadd.f32 %v234, %v235
    %v237 = vrot.slane %v236, 2
    %v238 = vadd.f32 %v236, %v237
    %v239 = vrot.slane %v238, 1
    %v240 = vadd.f32 %v238, %v239
    %v241 = vrcp.pop 16.0
    %v242 = vmul.f32 %v240, %v241
    %v243 = vsub.f32 %v223, %v242
    %v244 = vsub.f32 %v228, %v242
    %v245 = vmul.f32 %v243, %v243
    %v246 = vmul.f32 %v244, %v244
    %v247 = vsel %vm231, %v245, 0.0
    %v248 = vsel %vm231, %v246, 0.0
    %v249 = vadd.f32 %v247, %v248
    %v250 = vrot.slane %v249, 4
    %v251 = vadd.f32 %v249, %v250
    %v252 = vrot.slane %v251, 2
    %v253 = vadd.f32 %v251, %v252
    %v254 = vrot.slane %v253, 1
    %v255 = vadd.f32 %v253, %v254
    %v256 = vmul.f32 %v255, %v241
    %v257 = vadd.f32 %v256, 1e-05
    %v258 = vrsqrt.pop %v257
    %v259 = vmul.f32 %v243, %v258
    %v260 = vmul.f32 %v244, %v258
    %v261 = vld [vmem:[%s3] sm:$0x1]
    %v263 = vlaneseq
    %v264 = vshrl.u32 %v263, 7
    %v265 = vsub.s32 0, %v264
    %v266 = vrot.slane %v261, %v265
    %v268 = vmul.f32 %v259, %v266
    %v269 = vmul.f32 %v260, %v266
    %v270 = vld [vmem:[%s4] sm:$0x1]
    %v272 = vlaneseq
    %v273 = vshrl.u32 %v272, 7
    %v274 = vsub.s32 0, %v273
    %v275 = vrot.slane %v270, %v274
    %v277 = vadd.f32 %v268, %v275
    %v278 = vadd.f32 %v269, %v275
    %s279 = sld [smem:[#allocation2]]
    %vm280 = vcmp.gt.f32.partialorder %v277, 0.0
    %vm281 = vcmp.gt.f32.partialorder %v278, 0.0
    %v282 = vstv %s279
    %v283 = vmul.f32 %v282, %v277
    %v284 = vmul.f32 %v282, %v278
    %v285 = vsel %vm280, %v277, %v283
    %v286 = vsel %vm281, %v278, %v284
    %v287 = vld [vmem:[%s5] sm:$0xff]
    %v288 = vld [vmem:[%s5 + $0x8] sm:$0xff]
    %v289 = vld [vmem:[%s5 + $0x10] sm:$0xff]
    %v290 = vld [vmem:[%s5 + $0x18] sm:$0xff]
    %v291 = vld [vmem:[%s6] sm:$0x1]
    %v293 = vlaneseq
    %v294 = vshrl.u32 %v293, 7
    %v295 = vsub.s32 0, %v294
    %v296 = vrot.slane %v291, %v295
    %v299 = vsel %vm231, %v285, 0
    %v302 = vsel %vm231, %v286, 0
    %304 = vmatprep.subr.mxu0 0.0
    %305 = vmatpush1.msra.mxu0 %v287
    %306 = vmatprep.subr.mxu0 0.0
    %307 = vmatpush1.msra.mxu0 %v288
    %308 = vmatprep.subr.mxu0 0.0
    %309 = vmatpush1.msra.mxu0 %v289
    %310 = vmatprep.subr.mxu0 0.0
    %311 = vmatpush1.msra.mxu0 %v290
    %312 = vmatprep.subr.mxu0 0.0
    %313 = vmatpush1.msra.mxu0 0.0
    %314 = vmatprep.subr.mxu0 0.0
    %315 = vmatpush1.msra.mxu0 0.0
    %316 = vmatprep.subr.mxu0 0.0
    %317 = vmatpush1.msra.mxu0 0.0
    %318 = vmatprep.subr.mxu0 0.0
    %319 = vmatpush1.msra.mxu0 0.0
    %320 = vmatprep.subr.mxu0 0.0
    %321 = vmatpush1.msra.mxu0 0.0
    %322 = vmatprep.subr.mxu0 0.0
    %323 = vmatpush1.msra.mxu0 0.0
    %324 = vmatprep.subr.mxu0 0.0
    %325 = vmatpush1.msra.mxu0 0.0
    %326 = vmatprep.subr.mxu0 0.0
    %327 = vmatpush1.msra.mxu0 0.0
    %328 = vmatprep.subr.mxu0 0.0
    %329 = vmatpush1.msra.mxu0 0.0
    %330 = vmatprep.subr.mxu0 0.0
    %331 = vmatpush1.msra.mxu0 0.0
    %332 = vmatprep.subr.mxu0 0.0
    %333 = vmatpush1.msra.mxu0 0.0
    %334 = vmatprep.subr.mxu0 0.0
    %335 = vmatpush1.msra.mxu0 0.0
    %336 = vmatprep.subr.mxu0 0.0
    %337 = vmatpush1.msra.mxu0 0.0
    %338 = vmatprep.subr.mxu0 0.0
    %339 = vmatpush1.msra.mxu0 0.0
    %340 = vmatprep.subr.mxu0 0.0
    %341 = vmatpush1.msra.mxu0 0.0
    %342 = vmatprep.subr.mxu0 0.0
    %343 = vmatpush1.msra.mxu0 0.0
    %344 = vmatprep.subr.mxu0 0.0
    %345 = vmatpush1.msra.mxu0 0.0
    %346 = vmatprep.subr.mxu0 0.0
    %347 = vmatpush1.msra.mxu0 0.0
    %348 = vmatprep.subr.mxu0 0.0
    %349 = vmatpush1.msra.mxu0 0.0
    %350 = vmatprep.subr.mxu0 0.0
    %351 = vmatpush1.msra.mxu0 0.0
    %352 = vmatprep.subr.mxu0 0.0
    %353 = vmatpush1.msra.mxu0 0.0
    %354 = vmatprep.subr.mxu0 0.0
    %355 = vmatpush1.msra.mxu0 0.0
    %356 = vmatprep.subr.mxu0 0.0
    %357 = vmatpush1.msra.mxu0 0.0
    %358 = vmatprep.subr.mxu0 0.0
    %359 = vmatpush1.msra.mxu0 0.0
    %360 = vmatprep.subr.mxu0 0.0
    %361 = vmatpush1.msra.mxu0 0.0
    %362 = vmatprep.subr.mxu0 0.0
    %363 = vmatpush1.msra.mxu0 0.0
    %364 = vmatprep.subr.mxu0 0.0
    %365 = vmatpush1.msra.mxu0 0.0
    %366 = vmatprep.subr.mxu0 0.0
    %367 = vmatpush1.msra.mxu0 0.0
    %368 = vmatprep.mubr.f32.mxu0 0.0
    %369 = vmatmul.mubr.f32.gmra.mrb[0].mxu0 %v299
    %v370 = vpop.f32.mrb[0].mxu0
    %v371 = vadd.f32 %v296, %v370
    %v372 = vpop.f32.mrb[0].mxu0
    %373 = vmatprep.mubr.f32.mxu0 0.0
    %374 = vmatmul.mubr.f32.gmra.mrb[0].mxu0 %v302
    %v375 = vpop.f32.mrb[0].mxu0
    %v376 = vadd.f32 %v296, %v375
    %v377 = vpop.f32.mrb[0].mxu0
    %378 = vdwg.mxu0
    %v379 = vld [vmem:[%s7] sm:$0xff]
    %v380 = vld [vmem:[%s7 + $0x8] sm:$0xff]
    %v381 = vld [vmem:[%s7 + $0x10] sm:$0xff]
    %v382 = vld [vmem:[%s7 + $0x18] sm:$0xff]
    %v383 = vld [vmem:[#allocation9] sm:$0xff]
    %v384 = vld [vmem:[#allocation9 + $0x8] sm:$0xff]
    %v385 = vld [vmem:[#allocation9 + $0x10] sm:$0xff]
    %v386 = vld [vmem:[#allocation9 + $0x18] sm:$0xff]
    %v387 = vld [vmem:[#allocation9 + $0x20] sm:$0xff]
    %v388 = vld [vmem:[#allocation9 + $0x28] sm:$0xff]
    %v389 = vld [vmem:[#allocation9 + $0x30] sm:$0xff]
    %v390 = vld [vmem:[#allocation9 + $0x38] sm:$0xff]
    %v391 = vld [vmem:[#allocation9 + $0x40] sm:$0xff]
    %v392 = vld [vmem:[#allocation9 + $0x48] sm:$0xff]
    %v393 = vld [vmem:[#allocation9 + $0x50] sm:$0xff]
    %v394 = vld [vmem:[#allocation9 + $0x58] sm:$0xff]
    %v395 = vld [vmem:[#allocation9 + $0x60] sm:$0xff]
    %v396 = vld [vmem:[#allocation9 + $0x68] sm:$0xff]
    %v397 = vld [vmem:[#allocation9 + $0x70] sm:$0xff]
    %v398 = vld [vmem:[#allocation9 + $0x78] sm:$0xff]
    %v399 = vld [vmem:[#allocation9 + $0x80] sm:$0xff]
    %v400 = vld [vmem:[#allocation9 + $0x88] sm:$0xff]
    %v401 = vld [vmem:[#allocation9 + $0x90] sm:$0xff]
    %v402 = vld [vmem:[#allocation9 + $0x98] sm:$0xff]
    %v403 = vld [vmem:[#allocation9 + $0xa0] sm:$0xff]
    %v404 = vld [vmem:[#allocation9 + $0xa8] sm:$0xff]
    %v405 = vld [vmem:[#allocation9 + $0xb0] sm:$0xff]
    %v406 = vld [vmem:[#allocation9 + $0xb8] sm:$0xff]
    %v407 = vld [vmem:[#allocation9 + $0xc0] sm:$0xff]
    %v408 = vld [vmem:[#allocation9 + $0xc8] sm:$0xff]
    %v409 = vld [vmem:[#allocation9 + $0xd0] sm:$0xff]
    %v410 = vld [vmem:[#allocation9 + $0xd8] sm:$0xff]
    %v411 = vld [vmem:[#allocation9 + $0xe0] sm:$0xff]
    %v412 = vld [vmem:[#allocation9 + $0xe8] sm:$0xff]
    %v413 = vld [vmem:[#allocation9 + $0xf0] sm:$0xff]
    %v414 = vld [vmem:[#allocation9 + $0xf8] sm:$0xff]
    %v415 = vld [vmem:[#allocation8] sm:$0xff]
    %v416 = vld [vmem:[#allocation8 + $0x8] sm:$0xff]
    %v417 = vld [vmem:[%s10] sm:$0xff]
    %v418 = vld [vmem:[%s10 + $0x8] sm:$0xff]
    %v419 = vld [vmem:[%s10 + $0x10] sm:$0xff]
    %v420 = vld [vmem:[%s10 + $0x18] sm:$0xff]
    %v421 = vld [vmem:[%s11] sm:$0x1]
    %v422 = vld [vmem:[%s12] sm:$0xff]
    %v423 = vld [vmem:[%s12 + $0x8] sm:$0xff]
    %v424 = vld [vmem:[%s12 + $0x10] sm:$0xff]
    %v425 = vld [vmem:[%s12 + $0x18] sm:$0xff]
    %v426 = vpack.c.bf16 %v399, %v383
    %v427 = vpack.c.bf16 %v400, %v384
    %v428 = vpack.c.bf16 %v401, %v385
    %v429 = vpack.c.bf16 %v402, %v386
    %v430 = vpack.c.bf16 %v403, %v387
    %v431 = vpack.c.bf16 %v404, %v388
    %v432 = vpack.c.bf16 %v405, %v389
    %v433 = vpack.c.bf16 %v406, %v390
    %v434 = vpack.c.bf16 %v407, %v391
    %v435 = vpack.c.bf16 %v408, %v392
    %v436 = vpack.c.bf16 %v409, %v393
    %v437 = vpack.c.bf16 %v410, %v394
    %v438 = vpack.c.bf16 %v411, %v395
    %v439 = vpack.c.bf16 %v412, %v396
    %v440 = vpack.c.bf16 %v413, %v397
    %v441 = vpack.c.bf16 %v414, %v398
    %442 = vmatprep.subr.bf16.mxu0 %v427
    %443 = vmatpush1.bf16.xpose.msra.mxu0 %v426
    %444 = vmatprep.subr.bf16.mxu0 0
    %445 = vmatpush1.bf16.xpose.msra.mxu0 0
    %446 = vmatprep.subr.bf16.mxu0 0
    %447 = vmatpush1.bf16.xpose.msra.mxu0 0
    %448 = vmatprep.subr.bf16.mxu0 0
    %449 = vmatpush1.bf16.xpose.msra.mxu0 0
    %450 = vmatprep.subr.bf16.mxu0 0
    %451 = vmatpush1.bf16.xpose.msra.mxu0 0
    %452 = vmatprep.subr.bf16.mxu0 0
    %453 = vmatpush1.bf16.xpose.msra.mxu0 0
    %454 = vmatprep.subr.bf16.mxu0 0
    %455 = vmatpush1.bf16.xpose.msra.mxu0 0
    %456 = vmatprep.subr.bf16.mxu0 0
    %457 = vmatpush1.bf16.xpose.msra.mxu0 0
    %458 = vmatprep.subr.bf16.mxu0 0
    %459 = vmatpush1.bf16.xpose.msra.mxu0 0
    %460 = vmatprep.subr.bf16.mxu0 0
    %461 = vmatpush1.bf16.xpose.msra.mxu0 0
    %462 = vmatprep.subr.bf16.mxu0 0
    %463 = vmatpush1.bf16.xpose.msra.mxu0 0
    %464 = vmatprep.subr.bf16.mxu0 0
    %465 = vmatpush1.bf16.xpose.msra.mxu0 0
    %466 = vmatprep.subr.bf16.mxu0 0
    %467 = vmatpush1.bf16.xpose.msra.mxu0 0
    %468 = vmatprep.subr.bf16.mxu0 0
    %469 = vmatpush1.bf16.xpose.msra.mxu0 0
    %470 = vmatprep.subr.bf16.mxu0 0
    %471 = vmatpush1.bf16.xpose.msra.mxu0 0
    %472 = vmatprep.subr.bf16.mxu0 0
    %473 = vmatpush1.bf16.xpose.msra.mxu0 0
    %474 = vmatprep.mubr.bf16.mxu0 %v427
    %475 = vmatmul.mubr.bf16.gmra.mrb[0].mxu0 %v426
    %v476 = vpop.f32.mrb[0].mxu0
    %v477 = vadd.f32 0.0, %v476
    %v478 = vpop.f32.mrb[0].mxu0
    %v479 = vpop.f32.mrb[0].mxu0
    %v480 = vadd.f32 0.0, %v479
    %v481 = vpop.f32.mrb[0].mxu0
    %482 = vdwg.mxu0
    %483 = vmatprep.subr.bf16.mxu0 %v429
    %484 = vmatpush1.bf16.xpose.msra.mxu0 %v428
    %485 = vmatprep.subr.bf16.mxu0 0
    %486 = vmatpush1.bf16.xpose.msra.mxu0 0
    %487 = vmatprep.subr.bf16.mxu0 0
    %488 = vmatpush1.bf16.xpose.msra.mxu0 0
    %489 = vmatprep.subr.bf16.mxu0 0
    %490 = vmatpush1.bf16.xpose.msra.mxu0 0
    %491 = vmatprep.subr.bf16.mxu0 0
    %492 = vmatpush1.bf16.xpose.msra.mxu0 0
    %493 = vmatprep.subr.bf16.mxu0 0
    %494 = vmatpush1.bf16.xpose.msra.mxu0 0
    %495 = vmatprep.subr.bf16.mxu0 0
    %496 = vmatpush1.bf16.xpose.msra.mxu0 0
    %497 = vmatprep.subr.bf16.mxu0 0
    %498 = vmatpush1.bf16.xpose.msra.mxu0 0
    %499 = vmatprep.subr.bf16.mxu0 0
    %500 = vmatpush1.bf16.xpose.msra.mxu0 0
    %501 = vmatprep.subr.bf16.mxu0 0
    %502 = vmatpush1.bf16.xpose.msra.mxu0 0
    %503 = vmatprep.subr.bf16.mxu0 0
    %504 = vmatpush1.bf16.xpose.msra.mxu0 0
    %505 = vmatprep.subr.bf16.mxu0 0
    %506 = vmatpush1.bf16.xpose.msra.mxu0 0
    %507 = vmatprep.subr.bf16.mxu0 0
    %508 = vmatpush1.bf16.xpose.msra.mxu0 0
    %509 = vmatprep.subr.bf16.mxu0 0
    %510 = vmatpush1.bf16.xpose.msra.mxu0 0
    %511 = vmatprep.subr.bf16.mxu0 0
    %512 = vmatpush1.bf16.xpose.msra.mxu0 0
    %513 = vmatprep.subr.bf16.mxu0 0
    %514 = vmatpush1.bf16.xpose.msra.mxu0 0
    %515 = vmatprep.mubr.bf16.mxu0 %v429
    %516 = vmatmul.mubr.bf16.gmra.mrb[0].mxu0 %v428
    %v517 = vpop.f32.mrb[0].mxu0
    %v518 = vadd.f32 %v477, %v517
    %v519 = vpop.f32.mrb[0].mxu0
    %v520 = vpop.f32.mrb[0].mxu0
    %v521 = vadd.f32 %v480, %v520
    %v522 = vpop.f32.mrb[0].mxu0
    %523 = vdwg.mxu0
    %524 = vmatprep.subr.bf16.mxu0 %v431
    %525 = vmatpush1.bf16.xpose.msra.mxu0 %v430
    %526 = vmatprep.subr.bf16.mxu0 0
    %527 = vmatpush1.bf16.xpose.msra.mxu0 0
    %528 = vmatprep.subr.bf16.mxu0 0
    %529 = vmatpush1.bf16.xpose.msra.mxu0 0
    %530 = vmatprep.subr.bf16.mxu0 0
    %531 = vmatpush1.bf16.xpose.msra.mxu0 0
    %532 = vmatprep.subr.bf16.mxu0 0
    %533 = vmatpush1.bf16.xpose.msra.mxu0 0
    %534 = vmatprep.subr.bf16.mxu0 0
    %535 = vmatpush1.bf16.xpose.msra.mxu0 0
    %536 = vmatprep.subr.bf16.mxu0 0
    %537 = vmatpush1.bf16.xpose.msra.mxu0 0
    %538 = vmatprep.subr.bf16.mxu0 0
    %539 = vmatpush1.bf16.xpose.msra.mxu0 0
    %540 = vmatprep.subr.bf16.mxu0 0
    %541 = vmatpush1.bf16.xpose.msra.mxu0 0
    %542 = vmatprep.subr.bf16.mxu0 0
    %543 = vmatpush1.bf16.xpose.msra.mxu0 0
    %544 = vmatprep.subr.bf16.mxu0 0
    %545 = vmatpush1.bf16.xpose.msra.mxu0 0
    %546 = vmatprep.subr.bf16.mxu0 0
    %547 = vmatpush1.bf16.xpose.msra.mxu0 0
    %548 = vmatprep.subr.bf16.mxu0 0
    %549 = vmatpush1.bf16.xpose.msra.mxu0 0
    %550 = vmatprep.subr.bf16.mxu0 0
    %551 = vmatpush1.bf16.xpose.msra.mxu0 0
    %552 = vmatprep.subr.bf16.mxu0 0
    %553 = vmatpush1.bf16.xpose.msra.mxu0 0
    %554 = vmatprep.subr.bf16.mxu0 0
    %555 = vmatpush1.bf16.xpose.msra.mxu0 0
    %556 = vmatprep.mubr.bf16.mxu0 %v431
    %557 = vmatmul.mubr.bf16.gmra.mrb[0].mxu0 %v430
    %v558 = vpop.f32.mrb[0].mxu0
    %v559 = vadd.f32 %v518, %v558
    %v560 = vpop.f32.mrb[0].mxu0
    %v561 = vpop.f32.mrb[0].mxu0
    %v562 = vadd.f32 %v521, %v561
    %v563 = vpop.f32.mrb[0].mxu0
    %564 = vdwg.mxu0
    %565 = vmatprep.subr.bf16.mxu0 %v433
    %566 = vmatpush1.bf16.xpose.msra.mxu0 %v432
    %567 = vmatprep.subr.bf16.mxu0 0
    %568 = vmatpush1.bf16.xpose.msra.mxu0 0
    %569 = vmatprep.subr.bf16.mxu0 0
    %570 = vmatpush1.bf16.xpose.msra.mxu0 0
    %571 = vmatprep.subr.bf16.mxu0 0
    %572 = vmatpush1.bf16.xpose.msra.mxu0 0
    %573 = vmatprep.subr.bf16.mxu0 0
    %574 = vmatpush1.bf16.xpose.msra.mxu0 0
    %575 = vmatprep.subr.bf16.mxu0 0
    %576 = vmatpush1.bf16.xpose.msra.mxu0 0
    %577 = vmatprep.subr.bf16.mxu0 0
    %578 = vmatpush1.bf16.xpose.msra.mxu0 0
    %579 = vmatprep.subr.bf16.mxu0 0
    %580 = vmatpush1.bf16.xpose.msra.mxu0 0
    %581 = vmatprep.subr.bf16.mxu0 0
    %582 = vmatpush1.bf16.xpose.msra.mxu0 0
    %583 = vmatprep.subr.bf16.mxu0 0
    %584 = vmatpush1.bf16.xpose.msra.mxu0 0
    %585 = vmatprep.subr.bf16.mxu0 0
    %586 = vmatpush1.bf16.xpose.msra.mxu0 0
    %587 = vmatprep.subr.bf16.mxu0 0
    %588 = vmatpush1.bf16.xpose.msra.mxu0 0
    %589 = vmatprep.subr.bf16.mxu0 0
    %590 = vmatpush1.bf16.xpose.msra.mxu0 0
    %591 = vmatprep.subr.bf16.mxu0 0
    %592 = vmatpush1.bf16.xpose.msra.mxu0 0
    %593 = vmatprep.subr.bf16.mxu0 0
    %594 = vmatpush1.bf16.xpose.msra.mxu0 0
    %595 = vmatprep.subr.bf16.mxu0 0
    %596 = vmatpush1.bf16.xpose.msra.mxu0 0
    %597 = vmatprep.mubr.bf16.mxu0 %v433
    %598 = vmatmul.mubr.bf16.gmra.mrb[0].mxu0 %v432
    %v599 = vpop.f32.mrb[0].mxu0
    %v600 = vadd.f32 %v559, %v599
    %v601 = vpop.f32.mrb[0].mxu0
    %v602 = vpop.f32.mrb[0].mxu0
    %v603 = vadd.f32 %v562, %v602
    %v604 = vpop.f32.mrb[0].mxu0
    %605 = vdwg.mxu0
    %606 = vmatprep.subr.bf16.mxu0 %v435
    %607 = vmatpush1.bf16.xpose.msra.mxu0 %v434
    %608 = vmatprep.subr.bf16.mxu0 0
    %609 = vmatpush1.bf16.xpose.msra.mxu0 0
    %610 = vmatprep.subr.bf16.mxu0 0
    %611 = vmatpush1.bf16.xpose.msra.mxu0 0
    %612 = vmatprep.subr.bf16.mxu0 0
    %613 = vmatpush1.bf16.xpose.msra.mxu0 0
    %614 = vmatprep.subr.bf16.mxu0 0
    %615 = vmatpush1.bf16.xpose.msra.mxu0 0
    %616 = vmatprep.subr.bf16.mxu0 0
    %617 = vmatpush1.bf16.xpose.msra.mxu0 0
    %618 = vmatprep.subr.bf16.mxu0 0
    %619 = vmatpush1.bf16.xpose.msra.mxu0 0
    %620 = vmatprep.subr.bf16.mxu0 0
    %621 = vmatpush1.bf16.xpose.msra.mxu0 0
    %622 = vmatprep.subr.bf16.mxu0 0
    %623 = vmatpush1.bf16.xpose.msra.mxu0 0
    %624 = vmatprep.subr.bf16.mxu0 0
    %625 = vmatpush1.bf16.xpose.msra.mxu0 0
    %626 = vmatprep.subr.bf16.mxu0 0
    %627 = vmatpush1.bf16.xpose.msra.mxu0 0
    %628 = vmatprep.subr.bf16.mxu0 0
    %629 = vmatpush1.bf16.xpose.msra.mxu0 0
    %630 = vmatprep.subr.bf16.mxu0 0
    %631 = vmatpush1.bf16.xpose.msra.mxu0 0
    %632 = vmatprep.subr.bf16.mxu0 0
    %633 = vmatpush1.bf16.xpose.msra.mxu0 0
    %634 = vmatprep.subr.bf16.mxu0 0
    %635 = vmatpush1.bf16.xpose.msra.mxu0 0
    %636 = vmatprep.subr.bf16.mxu0 0
    %637 = vmatpush1.bf16.xpose.msra.mxu0 0
    %638 = vmatprep.mubr.bf16.mxu0 %v435
    %639 = vmatmul.mubr.bf16.gmra.mrb[0].mxu0 %v434
    %v640 = vpop.f32.mrb[0].mxu0
    %v641 = vadd.f32 %v600, %v640
    %v642 = vpop.f32.mrb[0].mxu0
    %v643 = vpop.f32.mrb[0].mxu0
    %v644 = vadd.f32 %v603, %v643
    %v645 = vpop.f32.mrb[0].mxu0
    %646 = vdwg.mxu0
    %647 = vmatprep.subr.bf16.mxu0 %v437
    %648 = vmatpush1.bf16.xpose.msra.mxu0 %v436
    %649 = vmatprep.subr.bf16.mxu0 0
    %650 = vmatpush1.bf16.xpose.msra.mxu0 0
    %651 = vmatprep.subr.bf16.mxu0 0
    %652 = vmatpush1.bf16.xpose.msra.mxu0 0
    %653 = vmatprep.subr.bf16.mxu0 0
    %654 = vmatpush1.bf16.xpose.msra.mxu0 0
    %655 = vmatprep.subr.bf16.mxu0 0
    %656 = vmatpush1.bf16.xpose.msra.mxu0 0
    %657 = vmatprep.subr.bf16.mxu0 0
    %658 = vmatpush1.bf16.xpose.msra.mxu0 0
    %659 = vmatprep.subr.bf16.mxu0 0
    %660 = vmatpush1.bf16.xpose.msra.mxu0 0
    %661 = vmatprep.subr.bf16.mxu0 0
    %662 = vmatpush1.bf16.xpose.msra.mxu0 0
    %663 = vmatprep.subr.bf16.mxu0 0
    %664 = vmatpush1.bf16.xpose.msra.mxu0 0
    %665 = vmatprep.subr.bf16.mxu0 0
    %666 = vmatpush1.bf16.xpose.msra.mxu0 0
    %667 = vmatprep.subr.bf16.mxu0 0
    %668 = vmatpush1.bf16.xpose.msra.mxu0 0
    %669 = vmatprep.subr.bf16.mxu0 0
    %670 = vmatpush1.bf16.xpose.msra.mxu0 0
    %671 = vmatprep.subr.bf16.mxu0 0
    %672 = vmatpush1.bf16.xpose.msra.mxu0 0
    %673 = vmatprep.subr.bf16.mxu0 0
    %674 = vmatpush1.bf16.xpose.msra.mxu0 0
    %675 = vmatprep.subr.bf16.mxu0 0
    %676 = vmatpush1.bf16.xpose.msra.mxu0 0
    %677 = vmatprep.subr.bf16.mxu0 0
    %678 = vmatpush1.bf16.xpose.msra.mxu0 0
    %679 = vmatprep.mubr.bf16.mxu0 %v437
    %680 = vmatmul.mubr.bf16.gmra.mrb[0].mxu0 %v436
    %v681 = vpop.f32.mrb[0].mxu0
    %v682 = vadd.f32 %v641, %v681
    %v683 = vpop.f32.mrb[0].mxu0
    %v684 = vpop.f32.mrb[0].mxu0
    %v685 = vadd.f32 %v644, %v684
    %v686 = vpop.f32.mrb[0].mxu0
    %687 = vdwg.mxu0
    %688 = vmatprep.subr.bf16.mxu0 %v439
    %689 = vmatpush1.bf16.xpose.msra.mxu0 %v438
    %690 = vmatprep.subr.bf16.mxu0 0
    %691 = vmatpush1.bf16.xpose.msra.mxu0 0
    %692 = vmatprep.subr.bf16.mxu0 0
    %693 = vmatpush1.bf16.xpose.msra.mxu0 0
    %694 = vmatprep.subr.bf16.mxu0 0
    %695 = vmatpush1.bf16.xpose.msra.mxu0 0
    %696 = vmatprep.subr.bf16.mxu0 0
    %697 = vmatpush1.bf16.xpose.msra.mxu0 0
    %698 = vmatprep.subr.bf16.mxu0 0
    %699 = vmatpush1.bf16.xpose.msra.mxu0 0
    %700 = vmatprep.subr.bf16.mxu0 0
    %701 = vmatpush1.bf16.xpose.msra.mxu0 0
    %702 = vmatprep.subr.bf16.mxu0 0
    %703 = vmatpush1.bf16.xpose.msra.mxu0 0
    %704 = vmatprep.subr.bf16.mxu0 0
    %705 = vmatpush1.bf16.xpose.msra.mxu0 0
    %706 = vmatprep.subr.bf16.mxu0 0
    %707 = vmatpush1.bf16.xpose.msra.mxu0 0
    %708 = vmatprep.subr.bf16.mxu0 0
    %709 = vmatpush1.bf16.xpose.msra.mxu0 0
    %710 = vmatprep.subr.bf16.mxu0 0
    %711 = vmatpush1.bf16.xpose.msra.mxu0 0
    %712 = vmatprep.subr.bf16.mxu0 0
    %713 = vmatpush1.bf16.xpose.msra.mxu0 0
    %714 = vmatprep.subr.bf16.mxu0 0
    %715 = vmatpush1.bf16.xpose.msra.mxu0 0
    %716 = vmatprep.subr.bf16.mxu0 0
    %717 = vmatpush1.bf16.xpose.msra.mxu0 0
    %718 = vmatprep.subr.bf16.mxu0 0
    %719 = vmatpush1.bf16.xpose.msra.mxu0 0
    %720 = vmatprep.mubr.bf16.mxu0 %v439
    %721 = vmatmul.mubr.bf16.gmra.mrb[0].mxu0 %v438
    %v722 = vpop.f32.mrb[0].mxu0
    %v723 = vadd.f32 %v682, %v722
    %v724 = vpop.f32.mrb[0].mxu0
    %v725 = vpop.f32.mrb[0].mxu0
    %v726 = vadd.f32 %v685, %v725
    %v727 = vpop.f32.mrb[0].mxu0
    %728 = vdwg.mxu0
    %729 = vmatprep.subr.bf16.mxu0 %v441
    %730 = vmatpush1.bf16.xpose.msra.mxu0 %v440
    %731 = vmatprep.subr.bf16.mxu0 0
    %732 = vmatpush1.bf16.xpose.msra.mxu0 0
    %733 = vmatprep.subr.bf16.mxu0 0
    %734 = vmatpush1.bf16.xpose.msra.mxu0 0
    %735 = vmatprep.subr.bf16.mxu0 0
    %736 = vmatpush1.bf16.xpose.msra.mxu0 0
    %737 = vmatprep.subr.bf16.mxu0 0
    %738 = vmatpush1.bf16.xpose.msra.mxu0 0
    %739 = vmatprep.subr.bf16.mxu0 0
    %740 = vmatpush1.bf16.xpose.msra.mxu0 0
    %741 = vmatprep.subr.bf16.mxu0 0
    %742 = vmatpush1.bf16.xpose.msra.mxu0 0
    %743 = vmatprep.subr.bf16.mxu0 0
    %744 = vmatpush1.bf16.xpose.msra.mxu0 0
    %745 = vmatprep.subr.bf16.mxu0 0
    %746 = vmatpush1.bf16.xpose.msra.mxu0 0
    %747 = vmatprep.subr.bf16.mxu0 0
    %748 = vmatpush1.bf16.xpose.msra.mxu0 0
    %749 = vmatprep.subr.bf16.mxu0 0
    %750 = vmatpush1.bf16.xpose.msra.mxu0 0
    %751 = vmatprep.subr.bf16.mxu0 0
    %752 = vmatpush1.bf16.xpose.msra.mxu0 0
    %753 = vmatprep.subr.bf16.mxu0 0
    %754 = vmatpush1.bf16.xpose.msra.mxu0 0
    %755 = vmatprep.subr.bf16.mxu0 0
    %756 = vmatpush1.bf16.xpose.msra.mxu0 0
    %757 = vmatprep.subr.bf16.mxu0 0
    %758 = vmatpush1.bf16.xpose.msra.mxu0 0
    %759 = vmatprep.subr.bf16.mxu0 0
    %760 = vmatpush1.bf16.xpose.msra.mxu0 0
    %761 = vmatprep.mubr.bf16.mxu0 %v441
    %762 = vmatmul.mubr.bf16.gmra.mrb[0].mxu0 %v440
    %v763 = vpop.f32.mrb[0].mxu0
    %v764 = vadd.f32 %v723, %v763
    %v765 = vpop.f32.mrb[0].mxu0
    %v766 = vpop.f32.mrb[0].mxu0
    %v767 = vadd.f32 %v726, %v766
    %v768 = vpop.f32.mrb[0].mxu0
    %769 = vdwg.mxu0
    %v770 = vlaneseq
    %v771 = vshrl.u32 %v770, 7
    %v772 = vadd.s32 %v771, 8
    %v773 = vlaneseq
    %v774 = vand.u32 %v773, 127
    %vm775 = vcmp.eq.s32.totalorder %v771, %v774
    %vm776 = vcmp.eq.s32.totalorder %v772, %v774
    %v777 = vsel %vm775, 1, 0
    %v778 = vsel %vm776, 1, 0
    %v779 = vcvt.s32.f32 %v777
    %v780 = vcvt.s32.f32 %v778
    %v781 = vmul.f32 %v764, %v779
    %v782 = vmul.f32 %v767, %v780
    %vm783 = vcmask 130048
    %v784 = vsel %vm783, %v781, 0.0
    %785 = vadd.xlane.f32.xlu0 %v784
    %v786 = vpop.xlane.xlu0 %785
    %v787 = vsel %vm783, %v782, 0.0
    %788 = vadd.xlane.f32.xlu0 %v787
    %v789 = vpop.xlane.xlu0 %788
    %v790 = vadd.f32 %v784, %v787
    %v791 = vrot.slane %v790, 4
    %v792 = vadd.f32 %v790, %v791
    %v793 = vrot.slane %v792, 2
    %v794 = vadd.f32 %v792, %v793
    %v795 = vrot.slane %v794, 1
    %v796 = vadd.f32 %v794, %v795
    %v797 = vmul.f32 %v786, %v796
    %v798 = vmul.f32 %v789, %v796
    %v799 = vadd.f32 %v797, 1e-12
    %v800 = vadd.f32 %v798, 1e-12
    %v801 = vrsqrt.pop %v799
    %v802 = vrsqrt.pop %v800
    %v803 = vmul.f32 %v764, %v801
    %v804 = vmul.f32 %v767, %v802
    %v805 = vmul.f32 %v803, %v415
    %v806 = vmul.f32 %v804, %v416
    %v808 = vlaneseq
    %v809 = vshrl.u32 %v808, 7
    %v810 = vsub.s32 0, %v809
    %v811 = vrot.slane %v421, %v810
    %v814 = vsel %vm231, %v371, 0
    %v817 = vsel %vm231, %v376, 0
    %819 = vmatprep.subr.mxu0 0.0
    %820 = vmatpush1.msra.mxu0 %v417
    %821 = vmatprep.subr.mxu0 0.0
    %822 = vmatpush1.msra.mxu0 %v418
    %823 = vmatprep.subr.mxu0 0.0
    %824 = vmatpush1.msra.mxu0 %v419
    %825 = vmatprep.subr.mxu0 0.0
    %826 = vmatpush1.msra.mxu0 %v420
    %827 = vmatprep.subr.mxu0 0.0
    %828 = vmatpush1.msra.mxu0 0.0
    %829 = vmatprep.subr.mxu0 0.0
    %830 = vmatpush1.msra.mxu0 0.0
    %831 = vmatprep.subr.mxu0 0.0
    %832 = vmatpush1.msra.mxu0 0.0
    %833 = vmatprep.subr.mxu0 0.0
    %834 = vmatpush1.msra.mxu0 0.0
    %835 = vmatprep.subr.mxu0 0.0
    %836 = vmatpush1.msra.mxu0 0.0
    %837 = vmatprep.subr.mxu0 0.0
    %838 = vmatpush1.msra.mxu0 0.0
    %839 = vmatprep.subr.mxu0 0.0
    %840 = vmatpush1.msra.mxu0 0.0
    %841 = vmatprep.subr.mxu0 0.0
    %842 = vmatpush1.msra.mxu0 0.0
    %843 = vmatprep.subr.mxu0 0.0
    %844 = vmatpush1.msra.mxu0 0.0
    %845 = vmatprep.subr.mxu0 0.0
    %846 = vmatpush1.msra.mxu0 0.0
    %847 = vmatprep.subr.mxu0 0.0
    %848 = vmatpush1.msra.mxu0 0.0
    %849 = vmatprep.subr.mxu0 0.0
    %850 = vmatpush1.msra.mxu0 0.0
    %851 = vmatprep.subr.mxu0 0.0
    %852 = vmatpush1.msra.mxu0 0.0
    %853 = vmatprep.subr.mxu0 0.0
    %854 = vmatpush1.msra.mxu0 0.0
    %855 = vmatprep.subr.mxu0 0.0
    %856 = vmatpush1.msra.mxu0 0.0
    %857 = vmatprep.subr.mxu0 0.0
    %858 = vmatpush1.msra.mxu0 0.0
    %859 = vmatprep.subr.mxu0 0.0
    %860 = vmatpush1.msra.mxu0 0.0
    %861 = vmatprep.subr.mxu0 0.0
    %862 = vmatpush1.msra.mxu0 0.0
    %863 = vmatprep.subr.mxu0 0.0
    %864 = vmatpush1.msra.mxu0 0.0
    %865 = vmatprep.subr.mxu0 0.0
    %866 = vmatpush1.msra.mxu0 0.0
    %867 = vmatprep.subr.mxu0 0.0
    %868 = vmatpush1.msra.mxu0 0.0
    %869 = vmatprep.subr.mxu0 0.0
    %870 = vmatpush1.msra.mxu0 0.0
    %871 = vmatprep.subr.mxu0 0.0
    %872 = vmatpush1.msra.mxu0 0.0
    %873 = vmatprep.subr.mxu0 0.0
    %874 = vmatpush1.msra.mxu0 0.0
    %875 = vmatprep.subr.mxu0 0.0
    %876 = vmatpush1.msra.mxu0 0.0
    %877 = vmatprep.subr.mxu0 0.0
    %878 = vmatpush1.msra.mxu0 0.0
    %879 = vmatprep.subr.mxu0 0.0
    %880 = vmatpush1.msra.mxu0 0.0
    %881 = vmatprep.subr.mxu0 0.0
    %882 = vmatpush1.msra.mxu0 0.0
    %883 = vmatprep.mubr.f32.mxu0 0.0
    %884 = vmatmul.mubr.f32.gmra.mrb[0].mxu0 %v814
    %v885 = vpop.f32.mrb[0].mxu0
    %v886 = vadd.f32 %v811, %v885
    %v887 = vpop.f32.mrb[0].mxu0
    %888 = vmatprep.mubr.f32.mxu0 0.0
    %889 = vmatmul.mubr.f32.gmra.mrb[0].mxu0 %v817
    %v890 = vpop.f32.mrb[0].mxu0
    %v891 = vadd.f32 %v811, %v890
    %v892 = vpop.f32.mrb[0].mxu0
    %893 = vdwg.mxu0
    %v895 = vsel %vm783, %v805, 0
    %v898 = vsel %vm783, %v806, 0
    %900 = vmatprep.subr.mxu0 0.0
    %901 = vmatpush1.msra.mxu0 %v886
    %902 = vmatprep.subr.mxu0 0.0
    %903 = vmatpush1.msra.mxu0 %v891
    %904 = vmatprep.subr.mxu0 0.0
    %905 = vmatpush1.msra.mxu0 0.0
    %906 = vmatprep.subr.mxu0 0.0
    %907 = vmatpush1.msra.mxu0 0.0
    %908 = vmatprep.subr.mxu0 0.0
    %909 = vmatpush1.msra.mxu0 0.0
    %910 = vmatprep.subr.mxu0 0.0
    %911 = vmatpush1.msra.mxu0 0.0
    %912 = vmatprep.subr.mxu0 0.0
    %913 = vmatpush1.msra.mxu0 0.0
    %914 = vmatprep.subr.mxu0 0.0
    %915 = vmatpush1.msra.mxu0 0.0
    %916 = vmatprep.subr.mxu0 0.0
    %917 = vmatpush1.msra.mxu0 0.0
    %918 = vmatprep.subr.mxu0 0.0
    %919 = vmatpush1.msra.mxu0 0.0
    %920 = vmatprep.subr.mxu0 0.0
    %921 = vmatpush1.msra.mxu0 0.0
    %922 = vmatprep.subr.mxu0 0.0
    %923 = vmatpush1.msra.mxu0 0.0
    %924 = vmatprep.subr.mxu0 0.0
    %925 = vmatpush1.msra.mxu0 0.0
    %926 = vmatprep.subr.mxu0 0.0
    %927 = vmatpush1.msra.mxu0 0.0
    %928 = vmatprep.subr.mxu0 0.0
    %929 = vmatpush1.msra.mxu0 0.0
    %930 = vmatprep.subr.mxu0 0.0
    %931 = vmatpush1.msra.mxu0 0.0
    %932 = vmatprep.subr.mxu0 0.0
    %933 = vmatpush1.msra.mxu0 0.0
    %934 = vmatprep.subr.mxu0 0.0
    %935 = vmatpush1.msra.mxu0 0.0
    %936 = vmatprep.subr.mxu0 0.0
    %937 = vmatpush1.msra.mxu0 0.0
    %938 = vmatprep.subr.mxu0 0.0
    %939 = vmatpush1.msra.mxu0 0.0
    %940 = vmatprep.subr.mxu0 0.0
    %941 = vmatpush1.msra.mxu0 0.0
    %942 = vmatprep.subr.mxu0 0.0
    %943 = vmatpush1.msra.mxu0 0.0
    %944 = vmatprep.subr.mxu0 0.0
    %945 = vmatpush1.msra.mxu0 0.0
    %946 = vmatprep.subr.mxu0 0.0
    %947 = vmatpush1.msra.mxu0 0.0
    %948 = vmatprep.subr.mxu0 0.0
    %949 = vmatpush1.msra.mxu0 0.0
    %950 = vmatprep.subr.mxu0 0.0
    %951 = vmatpush1.msra.mxu0 0.0
    %952 = vmatprep.subr.mxu0 0.0
    %953 = vmatpush1.msra.mxu0 0.0
    %954 = vmatprep.subr.mxu0 0.0
    %955 = vmatpush1.msra.mxu0 0.0
    %956 = vmatprep.subr.mxu0 0.0
    %957 = vmatpush1.msra.mxu0 0.0
    %958 = vmatprep.subr.mxu0 0.0
    %959 = vmatpush1.msra.mxu0 0.0
    %960 = vmatprep.subr.mxu0 0.0
    %961 = vmatpush1.msra.mxu0 0.0
    %962 = vmatprep.subr.mxu0 0.0
    %963 = vmatpush1.msra.mxu0 0.0
    %964 = vmatprep.mubr.f32.mxu0 0.0
    %965 = vmatmul.mubr.f32.gmra.mrb[0].mxu0 %v895
    %v966 = vpop.f32.mrb[0].mxu0
    %v967 = vadd.f32 0.0, %v966
    %v968 = vpop.f32.mrb[0].mxu0
    %969 = vmatprep.mubr.f32.mxu0 0.0
    %970 = vmatmul.mubr.f32.gmra.mrb[0].mxu0 %v898
    %v971 = vpop.f32.mrb[0].mxu0
    %v972 = vadd.f32 0.0, %v971
    %v973 = vpop.f32.mrb[0].mxu0
    %974 = vdwg.mxu0
    %v976 = vsel %vm231, %v967, 0
    %v979 = vsel %vm231, %v972, 0
    %981 = vmatprep.subr.mxu0 0.0
    %982 = vmatpush1.msra.mxu0 %v422
    %983 = vmatprep.subr.mxu0 0.0
    %984 = vmatpush1.msra.mxu0 %v423
    %985 = vmatprep.subr.mxu0 0.0
    %986 = vmatpush1.msra.mxu0 %v424
    %987 = vmatprep.subr.mxu0 0.0
    %988 = vmatpush1.msra.mxu0 %v425
    %989 = vmatprep.subr.mxu0 0.0
    %990 = vmatpush1.msra.mxu0 0.0
    %991 = vmatprep.subr.mxu0 0.0
    %992 = vmatpush1.msra.mxu0 0.0
    %993 = vmatprep.subr.mxu0 0.0
    %994 = vmatpush1.msra.mxu0 0.0
    %995 = vmatprep.subr.mxu0 0.0
    %996 = vmatpush1.msra.mxu0 0.0
    %997 = vmatprep.subr.mxu0 0.0
    %998 = vmatpush1.msra.mxu0 0.0
    %999 = vmatprep.subr.mxu0 0.0
    %1000 = vmatpush1.msra.mxu0 0.0
    %1001 = vmatprep.subr.mxu0 0.0
    %1002 = vmatpush1.msra.mxu0 0.0
    %1003 = vmatprep.subr.mxu0 0.0
    %1004 = vmatpush1.msra.mxu0 0.0
    %1005 = vmatprep.subr.mxu0 0.0
    %1006 = vmatpush1.msra.mxu0 0.0
    %1007 = vmatprep.subr.mxu0 0.0
    %1008 = vmatpush1.msra.mxu0 0.0
    %1009 = vmatprep.subr.mxu0 0.0
    %1010 = vmatpush1.msra.mxu0 0.0
    %1011 = vmatprep.subr.mxu0 0.0
    %1012 = vmatpush1.msra.mxu0 0.0
    %1013 = vmatprep.subr.mxu0 0.0
    %1014 = vmatpush1.msra.mxu0 0.0
    %1015 = vmatprep.subr.mxu0 0.0
    %1016 = vmatpush1.msra.mxu0 0.0
    %1017 = vmatprep.subr.mxu0 0.0
    %1018 = vmatpush1.msra.mxu0 0.0
    %1019 = vmatprep.subr.mxu0 0.0
    %1020 = vmatpush1.msra.mxu0 0.0
    %1021 = vmatprep.subr.mxu0 0.0
    %1022 = vmatpush1.msra.mxu0 0.0
    %1023 = vmatprep.subr.mxu0 0.0
    %1024 = vmatpush1.msra.mxu0 0.0
    %1025 = vmatprep.subr.mxu0 0.0
    %1026 = vmatpush1.msra.mxu0 0.0
    %1027 = vmatprep.subr.mxu0 0.0
    %1028 = vmatpush1.msra.mxu0 0.0
    %1029 = vmatprep.subr.mxu0 0.0
    %1030 = vmatpush1.msra.mxu0 0.0
    %1031 = vmatprep.subr.mxu0 0.0
    %1032 = vmatpush1.msra.mxu0 0.0
    %1033 = vmatprep.subr.mxu0 0.0
    %1034 = vmatpush1.msra.mxu0 0.0
    %1035 = vmatprep.subr.mxu0 0.0
    %1036 = vmatpush1.msra.mxu0 0.0
    %1037 = vmatprep.subr.mxu0 0.0
    %1038 = vmatpush1.msra.mxu0 0.0
    %1039 = vmatprep.subr.mxu0 0.0
    %1040 = vmatpush1.msra.mxu0 0.0
    %1041 = vmatprep.subr.mxu0 0.0
    %1042 = vmatpush1.msra.mxu0 0.0
    %1043 = vmatprep.subr.mxu0 0.0
    %1044 = vmatpush1.msra.mxu0 0.0
    %1045 = vmatprep.mubr.f32.mxu0 0.0
    %1046 = vmatmul.mubr.f32.gmra.mrb[0].mxu0 %v976
    %v1047 = vpop.f32.mrb[0].mxu0
    %v1048 = vadd.f32 0.0, %v1047
    %v1049 = vpop.f32.mrb[0].mxu0
    %1050 = vmatprep.mubr.f32.mxu0 0.0
    %1051 = vmatmul.mubr.f32.gmra.mrb[0].mxu0 %v979
    %v1052 = vpop.f32.mrb[0].mxu0
    %v1053 = vadd.f32 0.0, %v1052
    %v1054 = vpop.f32.mrb[0].mxu0
    %1055 = vdwg.mxu0
    %1056 = vmatprep.subr.mxu0 0.0
    %1057 = vmatpush1.msra.mxu0 %v379
    %1058 = vmatprep.subr.mxu0 0.0
    %1059 = vmatpush1.msra.mxu0 %v380
    %1060 = vmatprep.subr.mxu0 0.0
    %1061 = vmatpush1.msra.mxu0 %v381
    %1062 = vmatprep.subr.mxu0 0.0
    %1063 = vmatpush1.msra.mxu0 %v382
    %1064 = vmatprep.subr.mxu0 0.0
    %1065 = vmatpush1.msra.mxu0 0.0
    %1066 = vmatprep.subr.mxu0 0.0
    %1067 = vmatpush1.msra.mxu0 0.0
    %1068 = vmatprep.subr.mxu0 0.0
    %1069 = vmatpush1.msra.mxu0 0.0
    %1070 = vmatprep.subr.mxu0 0.0
    %1071 = vmatpush1.msra.mxu0 0.0
    %1072 = vmatprep.subr.mxu0 0.0
    %1073 = vmatpush1.msra.mxu0 0.0
    %1074 = vmatprep.subr.mxu0 0.0
    %1075 = vmatpush1.msra.mxu0 0.0
    %1076 = vmatprep.subr.mxu0 0.0
    %1077 = vmatpush1.msra.mxu0 0.0
    %1078 = vmatprep.subr.mxu0 0.0
    %1079 = vmatpush1.msra.mxu0 0.0
    %1080 = vmatprep.subr.mxu0 0.0
    %1081 = vmatpush1.msra.mxu0 0.0
    %1082 = vmatprep.subr.mxu0 0.0
    %1083 = vmatpush1.msra.mxu0 0.0
    %1084 = vmatprep.subr.mxu0 0.0
    %1085 = vmatpush1.msra.mxu0 0.0
    %1086 = vmatprep.subr.mxu0 0.0
    %1087 = vmatpush1.msra.mxu0 0.0
    %1088 = vmatprep.subr.mxu0 0.0
    %1089 = vmatpush1.msra.mxu0 0.0
    %1090 = vmatprep.subr.mxu0 0.0
    %1091 = vmatpush1.msra.mxu0 0.0
    %1092 = vmatprep.subr.mxu0 0.0
    %1093 = vmatpush1.msra.mxu0 0.0
    %1094 = vmatprep.subr.mxu0 0.0
    %1095 = vmatpush1.msra.mxu0 0.0
    %1096 = vmatprep.subr.mxu0 0.0
    %1097 = vmatpush1.msra.mxu0 0.0
    %1098 = vmatprep.subr.mxu0 0.0
    %1099 = vmatpush1.msra.mxu0 0.0
    %1100 = vmatprep.subr.mxu0 0.0
    %1101 = vmatpush1.msra.mxu0 0.0
    %1102 = vmatprep.subr.mxu0 0.0
    %1103 = vmatpush1.msra.mxu0 0.0
    %1104 = vmatprep.subr.mxu0 0.0
    %1105 = vmatpush1.msra.mxu0 0.0
    %1106 = vmatprep.subr.mxu0 0.0
    %1107 = vmatpush1.msra.mxu0 0.0
    %1108 = vmatprep.subr.mxu0 0.0
    %1109 = vmatpush1.msra.mxu0 0.0
    %1110 = vmatprep.subr.mxu0 0.0
    %1111 = vmatpush1.msra.mxu0 0.0
    %1112 = vmatprep.subr.mxu0 0.0
    %1113 = vmatpush1.msra.mxu0 0.0
    %1114 = vmatprep.subr.mxu0 0.0
    %1115 = vmatpush1.msra.mxu0 0.0
    %1116 = vmatprep.subr.mxu0 0.0
    %1117 = vmatpush1.msra.mxu0 0.0
    %1118 = vmatprep.subr.mxu0 0.0
    %1119 = vmatpush1.msra.mxu0 0.0
    %1120 = vmatprep.mubr.f32.mxu0 0.0
    %1121 = vmatmul.mubr.f32.gmra.mrb[0].mxu0 %v814
    %v1122 = vpop.f32.mrb[0].mxu0
    %v1123 = vadd.f32 %v1048, %v1122
    %v1124 = vpop.f32.mrb[0].mxu0
    %1125 = vmatprep.mubr.f32.mxu0 0.0
    %1126 = vmatmul.mubr.f32.gmra.mrb[0].mxu0 %v817
    %v1127 = vpop.f32.mrb[0].mxu0
    %v1128 = vadd.f32 %v1053, %v1127
    %v1129 = vpop.f32.mrb[0].mxu0
    %1130 = vdwg.mxu0
    %v1131 = vld [vmem:[%s14] sm:$0xff]
    %v1132 = vld [vmem:[%s14 + $0x8] sm:$0xff]
    %v1133 = vld [vmem:[%s14 + $0x10] sm:$0xff]
    %v1134 = vld [vmem:[%s14 + $0x18] sm:$0xff]
    %v1135 = vld [vmem:[#allocation11] sm:$0xff]
    %v1136 = vld [vmem:[#allocation11 + $0x8] sm:$0xff]
    %v1137 = vld [vmem:[%s15] sm:$0xff]
    %v1138 = vld [vmem:[%s15 + $0x8] sm:$0xff]
    %v1139 = vld [vmem:[%s15 + $0x10] sm:$0xff]
    %v1140 = vld [vmem:[%s15 + $0x18] sm:$0xff]
    %v1141 = vld [vmem:[%s16] sm:$0x1]
    %v1142 = vld [vmem:[%s17] sm:$0xff]
    %v1143 = vld [vmem:[%s17 + $0x8] sm:$0xff]
    %v1144 = vld [vmem:[%s17 + $0x10] sm:$0xff]
    %v1145 = vld [vmem:[%s17 + $0x18] sm:$0xff]
    %v1146 = vpack.c.bf16 %v1133, %v1131
    %v1147 = vpack.c.bf16 %v1134, %v1132
    %1148 = vmatprep.subr.bf16.mxu0 %v1147
    %1149 = vmatpush1.bf16.xpose.msra.mxu0 %v1146
    %1150 = vmatprep.subr.bf16.mxu0 0
    %1151 = vmatpush1.bf16.xpose.msra.mxu0 0
    %1152 = vmatprep.subr.bf16.mxu0 0
    %1153 = vmatpush1.bf16.xpose.msra.mxu0 0
    %1154 = vmatprep.subr.bf16.mxu0 0
    %1155 = vmatpush1.bf16.xpose.msra.mxu0 0
    %1156 = vmatprep.subr.bf16.mxu0 0
    %1157 = vmatpush1.bf16.xpose.msra.mxu0 0
    %1158 = vmatprep.subr.bf16.mxu0 0
    %1159 = vmatpush1.bf16.xpose.msra.mxu0 0
    %1160 = vmatprep.subr.bf16.mxu0 0
    %1161 = vmatpush1.bf16.xpose.msra.mxu0 0
    %1162 = vmatprep.subr.bf16.mxu0 0
    %1163 = vmatpush1.bf16.xpose.msra.mxu0 0
    %1164 = vmatprep.subr.bf16.mxu0 0
    %1165 = vmatpush1.bf16.xpose.msra.mxu0 0
    %1166 = vmatprep.subr.bf16.mxu0 0
    %1167 = vmatpush1.bf16.xpose.msra.mxu0 0
    %1168 = vmatprep.subr.bf16.mxu0 0
    %1169 = vmatpush1.bf16.xpose.msra.mxu0 0
    %1170 = vmatprep.subr.bf16.mxu0 0
    %1171 = vmatpush1.bf16.xpose.msra.mxu0 0
    %1172 = vmatprep.subr.bf16.mxu0 0
    %1173 = vmatpush1.bf16.xpose.msra.mxu0 0
    %1174 = vmatprep.subr.bf16.mxu0 0
    %1175 = vmatpush1.bf16.xpose.msra.mxu0 0
    %1176 = vmatprep.subr.bf16.mxu0 0
    %1177 = vmatpush1.bf16.xpose.msra.mxu0 0
    %1178 = vmatprep.subr.bf16.mxu0 0
    %1179 = vmatpush1.bf16.xpose.msra.mxu0 0
    %1180 = vmatprep.mubr.bf16.mxu0 %v1147
    %1181 = vmatmul.mubr.bf16.gmra.mrb[0].mxu0 %v1146
    %v1182 = vpop.f32.mrb[0].mxu0
    %v1183 = vadd.f32 0.0, %v1182
    %v1184 = vpop.f32.mrb[0].mxu0
    %v1185 = vpop.f32.mrb[0].mxu0
    %v1186 = vadd.f32 0.0, %v1185
    %v1187 = vpop.f32.mrb[0].mxu0
    %1188 = vdwg.mxu0
    %v1189 = vmul.f32 %v1183, %v779
    %v1190 = vmul.f32 %v1186, %v780
    %v1191 = vsel %vm783, %v1189, 0.0
    %1192 = vadd.xlane.f32.xlu0 %v1191
    %v1193 = vpop.xlane.xlu0 %1192
    %v1194 = vsel %vm783, %v1190, 0.0
    %1195 = vadd.xlane.f32.xlu0 %v1194
    %v1196 = vpop.xlane.xlu0 %1195
    %v1197 = vadd.f32 %v1191, %v1194
    %v1198 = vrot.slane %v1197, 4
    %v1199 = vadd.f32 %v1197, %v1198
    %v1200 = vrot.slane %v1199, 2
    %v1201 = vadd.f32 %v1199, %v1200
    %v1202 = vrot.slane %v1201, 1
    %v1203 = vadd.f32 %v1201, %v1202
    %v1204 = vmul.f32 %v1193, %v1203
    %v1205 = vmul.f32 %v1196, %v1203
    %v1206 = vadd.f32 %v1204, 1e-12
    %v1207 = vadd.f32 %v1205, 1e-12
    %v1208 = vrsqrt.pop %v1206
    %v1209 = vrsqrt.pop %v1207
    %v1210 = vmul.f32 %v1183, %v1208
    %v1211 = vmul.f32 %v1186, %v1209
    %v1212 = vmul.f32 %v1210, %v1135
    %v1213 = vmul.f32 %v1211, %v1136
    %v1215 = vlaneseq
    %v1216 = vshrl.u32 %v1215, 7
    %v1217 = vsub.s32 0, %v1216
    %v1218 = vrot.slane %v1141, %v1217
    %1220 = vmatprep.subr.mxu0 0.0
    %1221 = vmatpush1.msra.mxu0 %v1137
    %1222 = vmatprep.subr.mxu0 0.0
    %1223 = vmatpush1.msra.mxu0 %v1138
    %1224 = vmatprep.subr.mxu0 0.0
    %1225 = vmatpush1.msra.mxu0 %v1139
    %1226 = vmatprep.subr.mxu0 0.0
    %1227 = vmatpush1.msra.mxu0 %v1140
    %1228 = vmatprep.subr.mxu0 0.0
    %1229 = vmatpush1.msra.mxu0 0.0
    %1230 = vmatprep.subr.mxu0 0.0
    %1231 = vmatpush1.msra.mxu0 0.0
    %1232 = vmatprep.subr.mxu0 0.0
    %1233 = vmatpush1.msra.mxu0 0.0
    %1234 = vmatprep.subr.mxu0 0.0
    %1235 = vmatpush1.msra.mxu0 0.0
    %1236 = vmatprep.subr.mxu0 0.0
    %1237 = vmatpush1.msra.mxu0 0.0
    %1238 = vmatprep.subr.mxu0 0.0
    %1239 = vmatpush1.msra.mxu0 0.0
    %1240 = vmatprep.subr.mxu0 0.0
    %1241 = vmatpush1.msra.mxu0 0.0
    %1242 = vmatprep.subr.mxu0 0.0
    %1243 = vmatpush1.msra.mxu0 0.0
    %1244 = vmatprep.subr.mxu0 0.0
    %1245 = vmatpush1.msra.mxu0 0.0
    %1246 = vmatprep.subr.mxu0 0.0
    %1247 = vmatpush1.msra.mxu0 0.0
    %1248 = vmatprep.subr.mxu0 0.0
    %1249 = vmatpush1.msra.mxu0 0.0
    %1250 = vmatprep.subr.mxu0 0.0
    %1251 = vmatpush1.msra.mxu0 0.0
    %1252 = vmatprep.subr.mxu0 0.0
    %1253 = vmatpush1.msra.mxu0 0.0
    %1254 = vmatprep.subr.mxu0 0.0
    %1255 = vmatpush1.msra.mxu0 0.0
    %1256 = vmatprep.subr.mxu0 0.0
    %1257 = vmatpush1.msra.mxu0 0.0
    %1258 = vmatprep.subr.mxu0 0.0
    %1259 = vmatpush1.msra.mxu0 0.0
    %1260 = vmatprep.subr.mxu0 0.0
    %1261 = vmatpush1.msra.mxu0 0.0
    %1262 = vmatprep.subr.mxu0 0.0
    %1263 = vmatpush1.msra.mxu0 0.0
    %1264 = vmatprep.subr.mxu0 0.0
    %1265 = vmatpush1.msra.mxu0 0.0
    %1266 = vmatprep.subr.mxu0 0.0
    %1267 = vmatpush1.msra.mxu0 0.0
    %1268 = vmatprep.subr.mxu0 0.0
    %1269 = vmatpush1.msra.mxu0 0.0
    %1270 = vmatprep.subr.mxu0 0.0
    %1271 = vmatpush1.msra.mxu0 0.0
    %1272 = vmatprep.subr.mxu0 0.0
    %1273 = vmatpush1.msra.mxu0 0.0
    %1274 = vmatprep.subr.mxu0 0.0
    %1275 = vmatpush1.msra.mxu0 0.0
    %1276 = vmatprep.subr.mxu0 0.0
    %1277 = vmatpush1.msra.mxu0 0.0
    %1278 = vmatprep.subr.mxu0 0.0
    %1279 = vmatpush1.msra.mxu0 0.0
    %1280 = vmatprep.subr.mxu0 0.0
    %1281 = vmatpush1.msra.mxu0 0.0
    %1282 = vmatprep.subr.mxu0 0.0
    %1283 = vmatpush1.msra.mxu0 0.0
    %1284 = vmatprep.mubr.f32.mxu0 0.0
    %1285 = vmatmul.mubr.f32.gmra.mrb[0].mxu0 %v814
    %v1286 = vpop.f32.mrb[0].mxu0
    %v1287 = vadd.f32 %v1218, %v1286
    %v1288 = vpop.f32.mrb[0].mxu0
    %1289 = vmatprep.mubr.f32.mxu0 0.0
    %1290 = vmatmul.mubr.f32.gmra.mrb[0].mxu0 %v817
    %v1291 = vpop.f32.mrb[0].mxu0
    %v1292 = vadd.f32 %v1218, %v1291
    %v1293 = vpop.f32.mrb[0].mxu0
    %1294 = vdwg.mxu0
    %v1296 = vsel %vm783, %v1212, 0
    %v1299 = vsel %vm783, %v1213, 0
    %1301 = vmatprep.subr.mxu0 0.0
    %1302 = vmatpush1.msra.mxu0 %v1287
    %1303 = vmatprep.subr.mxu0 0.0
    %1304 = vmatpush1.msra.mxu0 %v1292
    %1305 = vmatprep.subr.mxu0 0.0
    %1306 = vmatpush1.msra.mxu0 0.0
    %1307 = vmatprep.subr.mxu0 0.0
    %1308 = vmatpush1.msra.mxu0 0.0
    %1309 = vmatprep.subr.mxu0 0.0
    %1310 = vmatpush1.msra.mxu0 0.0
    %1311 = vmatprep.subr.mxu0 0.0
    %1312 = vmatpush1.msra.mxu0 0.0
    %1313 = vmatprep.subr.mxu0 0.0
    %1314 = vmatpush1.msra.mxu0 0.0
    %1315 = vmatprep.subr.mxu0 0.0
    %1316 = vmatpush1.msra.mxu0 0.0
    %1317 = vmatprep.subr.mxu0 0.0
    %1318 = vmatpush1.msra.mxu0 0.0
    %1319 = vmatprep.subr.mxu0 0.0
    %1320 = vmatpush1.msra.mxu0 0.0
    %1321 = vmatprep.subr.mxu0 0.0
    %1322 = vmatpush1.msra.mxu0 0.0
    %1323 = vmatprep.subr.mxu0 0.0
    %1324 = vmatpush1.msra.mxu0 0.0
    %1325 = vmatprep.subr.mxu0 0.0
    %1326 = vmatpush1.msra.mxu0 0.0
    %1327 = vmatprep.subr.mxu0 0.0
    %1328 = vmatpush1.msra.mxu0 0.0
    %1329 = vmatprep.subr.mxu0 0.0
    %1330 = vmatpush1.msra.mxu0 0.0
    %1331 = vmatprep.subr.mxu0 0.0
    %1332 = vmatpush1.msra.mxu0 0.0
    %1333 = vmatprep.subr.mxu0 0.0
    %1334 = vmatpush1.msra.mxu0 0.0
    %1335 = vmatprep.subr.mxu0 0.0
    %1336 = vmatpush1.msra.mxu0 0.0
    %1337 = vmatprep.subr.mxu0 0.0
    %1338 = vmatpush1.msra.mxu0 0.0
    %1339 = vmatprep.subr.mxu0 0.0
    %1340 = vmatpush1.msra.mxu0 0.0
    %1341 = vmatprep.subr.mxu0 0.0
    %1342 = vmatpush1.msra.mxu0 0.0
    %1343 = vmatprep.subr.mxu0 0.0
    %1344 = vmatpush1.msra.mxu0 0.0
    %1345 = vmatprep.subr.mxu0 0.0
    %1346 = vmatpush1.msra.mxu0 0.0
    %1347 = vmatprep.subr.mxu0 0.0
    %1348 = vmatpush1.msra.mxu0 0.0
    %1349 = vmatprep.subr.mxu0 0.0
    %1350 = vmatpush1.msra.mxu0 0.0
    %1351 = vmatprep.subr.mxu0 0.0
    %1352 = vmatpush1.msra.mxu0 0.0
    %1353 = vmatprep.subr.mxu0 0.0
    %1354 = vmatpush1.msra.mxu0 0.0
    %1355 = vmatprep.subr.mxu0 0.0
    %1356 = vmatpush1.msra.mxu0 0.0
    %1357 = vmatprep.subr.mxu0 0.0
    %1358 = vmatpush1.msra.mxu0 0.0
    %1359 = vmatprep.subr.mxu0 0.0
    %1360 = vmatpush1.msra.mxu0 0.0
    %1361 = vmatprep.subr.mxu0 0.0
    %1362 = vmatpush1.msra.mxu0 0.0
    %1363 = vmatprep.subr.mxu0 0.0
    %1364 = vmatpush1.msra.mxu0 0.0
    %1365 = vmatprep.mubr.f32.mxu0 0.0
    %1366 = vmatmul.mubr.f32.gmra.mrb[0].mxu0 %v1296
    %v1367 = vpop.f32.mrb[0].mxu0
    %v1368 = vadd.f32 0.0, %v1367
    %v1369 = vpop.f32.mrb[0].mxu0
    %1370 = vmatprep.mubr.f32.mxu0 0.0
    %1371 = vmatmul.mubr.f32.gmra.mrb[0].mxu0 %v1299
    %v1372 = vpop.f32.mrb[0].mxu0
    %v1373 = vadd.f32 0.0, %v1372
    %v1374 = vpop.f32.mrb[0].mxu0
    %1375 = vdwg.mxu0
    %v1377 = vsel %vm231, %v1368, 0
    %v1380 = vsel %vm231, %v1373, 0
    %1382 = vmatprep.subr.mxu0 0.0
    %1383 = vmatpush1.msra.mxu0 %v1142
    %1384 = vmatprep.subr.mxu0 0.0
    %1385 = vmatpush1.msra.mxu0 %v1143
    %1386 = vmatprep.subr.mxu0 0.0
    %1387 = vmatpush1.msra.mxu0 %v1144
    %1388 = vmatprep.subr.mxu0 0.0
    %1389 = vmatpush1.msra.mxu0 %v1145
    %1390 = vmatprep.subr.mxu0 0.0
    %1391 = vmatpush1.msra.mxu0 0.0
    %1392 = vmatprep.subr.mxu0 0.0
    %1393 = vmatpush1.msra.mxu0 0.0
    %1394 = vmatprep.subr.mxu0 0.0
    %1395 = vmatpush1.msra.mxu0 0.0
    %1396 = vmatprep.subr.mxu0 0.0
    %1397 = vmatpush1.msra.mxu0 0.0
    %1398 = vmatprep.subr.mxu0 0.0
    %1399 = vmatpush1.msra.mxu0 0.0
    %1400 = vmatprep.subr.mxu0 0.0
    %1401 = vmatpush1.msra.mxu0 0.0
    %1402 = vmatprep.subr.mxu0 0.0
    %1403 = vmatpush1.msra.mxu0 0.0
    %1404 = vmatprep.subr.mxu0 0.0
    %1405 = vmatpush1.msra.mxu0 0.0
    %1406 = vmatprep.subr.mxu0 0.0
    %1407 = vmatpush1.msra.mxu0 0.0
    %1408 = vmatprep.subr.mxu0 0.0
    %1409 = vmatpush1.msra.mxu0 0.0
    %1410 = vmatprep.subr.mxu0 0.0
    %1411 = vmatpush1.msra.mxu0 0.0
    %1412 = vmatprep.subr.mxu0 0.0
    %1413 = vmatpush1.msra.mxu0 0.0
    %1414 = vmatprep.subr.mxu0 0.0
    %1415 = vmatpush1.msra.mxu0 0.0
    %1416 = vmatprep.subr.mxu0 0.0
    %1417 = vmatpush1.msra.mxu0 0.0
    %1418 = vmatprep.subr.mxu0 0.0
    %1419 = vmatpush1.msra.mxu0 0.0
    %1420 = vmatprep.subr.mxu0 0.0
    %1421 = vmatpush1.msra.mxu0 0.0
    %1422 = vmatprep.subr.mxu0 0.0
    %1423 = vmatpush1.msra.mxu0 0.0
    %1424 = vmatprep.subr.mxu0 0.0
    %1425 = vmatpush1.msra.mxu0 0.0
    %1426 = vmatprep.subr.mxu0 0.0
    %1427 = vmatpush1.msra.mxu0 0.0
    %1428 = vmatprep.subr.mxu0 0.0
    %1429 = vmatpush1.msra.mxu0 0.0
    %1430 = vmatprep.subr.mxu0 0.0
    %1431 = vmatpush1.msra.mxu0 0.0
    %1432 = vmatprep.subr.mxu0 0.0
    %1433 = vmatpush1.msra.mxu0 0.0
    %1434 = vmatprep.subr.mxu0 0.0
    %1435 = vmatpush1.msra.mxu0 0.0
    %1436 = vmatprep.subr.mxu0 0.0
    %1437 = vmatpush1.msra.mxu0 0.0
    %1438 = vmatprep.subr.mxu0 0.0
    %1439 = vmatpush1.msra.mxu0 0.0
    %1440 = vmatprep.subr.mxu0 0.0
    %1441 = vmatpush1.msra.mxu0 0.0
    %1442 = vmatprep.subr.mxu0 0.0
    %1443 = vmatpush1.msra.mxu0 0.0
    %1444 = vmatprep.subr.mxu0 0.0
    %1445 = vmatpush1.msra.mxu0 0.0
    %1446 = vmatprep.mubr.f32.mxu0 0.0
    %1447 = vmatmul.mubr.f32.gmra.mrb[0].mxu0 %v1377
    %v1448 = vpop.f32.mrb[0].mxu0
    %v1449 = vadd.f32 0.0, %v1448
    %v1450 = vpop.f32.mrb[0].mxu0
    %1451 = vmatprep.mubr.f32.mxu0 0.0
    %1452 = vmatmul.mubr.f32.gmra.mrb[0].mxu0 %v1380
    %v1453 = vpop.f32.mrb[0].mxu0
    %v1454 = vadd.f32 0.0, %v1453
    %v1455 = vpop.f32.mrb[0].mxu0
    %1456 = vdwg.mxu0
    %v1457 = vadd.f32 %v1123, %v1449
    %v1458 = vadd.f32 %v1128, %v1454
    %s1459 = sld [smem:[#allocation3]]
    %v1460 = vstv %s1459
    %v1461 = vadd.f32 %v1457, %v1460
    %v1462 = vadd.f32 %v1458, %v1460
    %vm1463 = vcmask 7168
    %1464 = vst.msk [vmem:[%s20] sm:$0xff] %vm1463, %v1461
    %1465 = vst.msk [vmem:[%s20 + $0x8] sm:$0xff] %vm1463, %v1462
    // Predicated region
    $region102: #{sef_mgn_2_forward.1} parent=1 // pred_check
      _
    $region103: #{sef_mgn_2_forward.1} parent=1 // pred_check_branch
      %1467 = sbr.rel (0) target = $region105
    $region104: #{sef_mgn_2_forward.1} parent=1 // pred_region
      _
    $region105: #{sef_mgn_2_forward.1} parent=1 // pred_fallthru
      _
    // Predicated region
    $region106: #{sef_mgn_2_forward.1} parent=1 // pred_check
      _
    $region107: #{sef_mgn_2_forward.1} parent=1 // pred_check_branch
      %1469 = sbr.rel (0) target = $region109
    $region108: #{sef_mgn_2_forward.1} parent=1 // pred_region
      _
    $region109: #{sef_mgn_2_forward.1} parent=1 // pred_fallthru
      _
    %1470 = vsyncpa [#allocation5], 1
    %1471 = vsyncpa [#allocation7], 1
    %1472 = vsyncpa [#allocation10], 1

</llo_original>
